<compile_context>
chip_gen: v7x
topology: tpu7x:2x2x1
jax: 0.10.0
libtpu: 0.0.40
codegen_flags: <defaults>
</compile_context>

<pallas_src>
import functools

import jax
import jax.numpy as jnp
from jax.experimental import pallas as pl
from jax.experimental.pallas import tpu as pltpu

BN_EPS = 1e-5
NEG_SLOPE = 0.1
LANE = 128
SUBLANE = 8


def _round_up(x, m):
    return (x + m - 1) // m * m


def _vmem_limit_bytes():
    # Generation-aware scoped-VMEM limit (v7x has only 64 MiB per TensorCore).
    try:
        info = pltpu.get_tpu_info()
        cap = getattr(info, "vmem_capacity_bytes", None)
        if cap:
            return int(min(cap * 3 // 4, 96 << 20))
    except Exception:
        pass
    return 48 << 20


def _pick_tm(m, k, coutp, budget_bytes):
    """Largest M-tile (multiple of 8) whose double-buffered working set fits."""
    m8 = _round_up(max(m, 1), SUBLANE)
    resident = k * coutp * 2  # bf16 weight slab stays resident
    tm = SUBLANE
    for cand in (8, 16, 32, 64, 128, 256, 512, 1024, 2048):
        if cand > m8:
            break
        # double-buffered bf16 patch tile + double-buffered f32 conv/out tile
        need = 2 * cand * k * 2 + 2 * cand * coutp * 4 + resident
        if need <= budget_bytes:
            tm = cand
    return tm


def _use_recompute(m, k, coutp):
    """Roofline pick: recompute conv in pass 2 vs. store f32 conv to HBM."""
    mxu = 400e12   # conservative bf16 MXU rate (f32 acc)
    hbm = 1.0e12   # conservative HBM bandwidth
    flops = 2.0 * m * k * coutp
    t_recompute = max(2.0 * flops / mxu,
                      (2.0 * m * k * 2 + m * coutp * 4) / hbm)
    t_store = max(flops / mxu,
                  (m * k * 2 + 3.0 * m * coutp * 4) / hbm)
    return t_recompute <= t_store


# ---------------------------------------------------------------------------
# Kernels
# ---------------------------------------------------------------------------


def _stats_kernel(patches_ref, w_ref, psum_ref, psq_ref, *, m_valid):
    """Recompute path, pass 1: per-tile partial BN statistics only."""
    i = pl.program_id(0)
    conv = jnp.dot(patches_ref[...], w_ref[...],
                   preferred_element_type=jnp.float32)
    tm, coutp = conv.shape
    # Mask rows past the real M (M was padded up to a multiple of TM).
    row = i * tm + jax.lax.broadcasted_iota(jnp.int32, (tm, coutp), 0)
    cv = jnp.where(row < m_valid, conv, 0.0)
    # Partial sums kept as an (8, Coutp) slab (sublane-partial); the final
    # reduction over tiles/sublanes is a tiny XLA op in the wrapper.
    cvr = cv.reshape(tm // SUBLANE, SUBLANE, coutp)
    psum_ref[...] = jnp.sum(cvr, axis=0)
    psq_ref[...] = jnp.sum(cvr * cvr, axis=0)


def _conv_bn_act_kernel(patches_ref, w_ref, scale_ref, shift_ref, out_ref):
    """Recompute path, pass 2: conv + folded BatchNorm + LeakyReLU."""
    conv = jnp.dot(patches_ref[...], w_ref[...],
                   preferred_element_type=jnp.float32)
    y = conv * scale_ref[...] + shift_ref[...]
    out_ref[...] = jnp.where(y > 0, y, NEG_SLOPE * y)


def _conv_stats_kernel(patches_ref, w_ref, conv_ref, psum_ref, psq_ref,
                       *, m_valid):
    """Store path, pass 1: conv tile (no bias; it cancels under BN) + stats."""
    i = pl.program_id(0)
    conv = jnp.dot(patches_ref[...], w_ref[...],
                   preferred_element_type=jnp.float32)
    conv_ref[...] = conv

    tm, coutp = conv.shape
    row = i * tm + jax.lax.broadcasted_iota(jnp.int32, (tm, coutp), 0)
    cv = jnp.where(row < m_valid, conv, 0.0)
    cvr = cv.reshape(tm // SUBLANE, SUBLANE, coutp)
    psum_ref[...] = jnp.sum(cvr, axis=0)
    psq_ref[...] = jnp.sum(cvr * cvr, axis=0)


def _bn_act_kernel(conv_ref, scale_ref, shift_ref, out_ref):
    """Store path, pass 2: y = conv*scale + shift, LeakyReLU (pure VPU)."""
    y = conv_ref[...] * scale_ref[...] + shift_ref[...]
    out_ref[...] = jnp.where(y > 0, y, NEG_SLOPE * y)


def _conv_act_kernel(patches_ref, w_ref, b_ref, out_ref):
    """bn_act=False path: conv + bias + LeakyReLU in one pass."""
    conv = jnp.dot(patches_ref[...], w_ref[...],
                   preferred_element_type=jnp.float32)
    y = conv + b_ref[...]
    out_ref[...] = jnp.where(y > 0, y, NEG_SLOPE * y)


# ---------------------------------------------------------------------------
# Wrapper
# ---------------------------------------------------------------------------


def _im2col(x, kh, kw, stride, padding):
    """x: [N, Cin, H, W] -> patches [N*OH*OW, Cin*KH*KW], plus (N, OH, OW)."""
    # TODO(synk): build patches inside the kernel from NHWC tiles with halos
    # (shifted slices) to avoid the KH*KW HBM blow-up of materialized im2col.
    n, cin, h, w = x.shape
    xp = jnp.pad(x, ((0, 0), (0, 0), (padding, padding), (padding, padding)))
    oh = (h + 2 * padding - kh) // stride + 1
    ow = (w + 2 * padding - kw) // stride + 1
    taps = []
    for ki in range(kh):
        for kj in range(kw):
            taps.append(xp[:, :,
                           ki:ki + stride * oh:stride,
                           kj:kj + stride * ow:stride])  # [N, Cin, OH, OW]
    p = jnp.stack(taps, axis=2)                            # [N, Cin, KH*KW, OH, OW]
    p = p.transpose(0, 3, 4, 1, 2).reshape(n * oh * ow, cin * kh * kw)
    return p, (n, oh, ow)


@functools.partial(jax.jit, static_argnames=("kernel_size", "stride", "padding",
                                             "bn_act"))
def cnn_block_forward(x, weight, bias, gamma, beta, *, kernel_size, stride,
                      padding, bn_act=True):
    """Forward pass of CNNBlock.

    x:      [N, Cin, H, W]  (NCHW, like PyTorch)
    weight: [Cout, Cin, KH, KW]
    bias:   [Cout]
    gamma/beta: [Cout] (BatchNorm affine params)
    returns [N, Cout, OH, OW]
    """
    kh = kw = kernel_size
    cout = weight.shape[0]

    patches, (n, oh, ow) = _im2col(x.astype(jnp.float32), kh, kw, stride,
                                   padding)
    m, k = patches.shape

    coutp = _round_up(cout, LANE)                 # lane-dense output channels
    tm = _pick_tm(m, k, coutp, budget_bytes=16 << 20)
    mp = _round_up(m, tm)
    n_tiles = mp // tm
    vmem_limit = _vmem_limit_bytes()

    # bf16 operands for the MXU (f32 accumulation inside the kernel).
    patches_p = jnp.pad(patches, ((0, mp - m), (0, 0))).astype(jnp.bfloat16)
    w2d = jnp.pad(weight.reshape(cout, -1).T.astype(jnp.float32),
                  ((0, 0), (0, coutp - cout))).astype(jnp.bfloat16)   # [K,Coutp]
    b2d = jnp.pad(bias.astype(jnp.float32), (0, coutp - cout)).reshape(1, coutp)

    comp_params = pltpu.CompilerParams(
        dimension_semantics=("parallel",),        # v7x: split M across 2 TCs
        vmem_limit_bytes=vmem_limit)

    patches_spec = pl.BlockSpec((tm, k), lambda i: (i, 0))
    w_spec = pl.BlockSpec((k, coutp), lambda i: (0, 0))        # resident
    vec_spec = pl.BlockSpec((1, coutp), lambda i: (0, 0))      # resident
    row_spec = pl.BlockSpec((tm, coutp), lambda i: (i, 0))
    stat_spec = pl.BlockSpec((SUBLANE, coutp), lambda i: (i, 0))

    conv_flops = 2 * mp * k * coutp
    patch_bytes = patches_p.size * 2
    w_bytes = w2d.size * 2
    out_bytes = mp * coutp * 4
    stat_bytes = 2 * n_tiles * SUBLANE * coutp * 4

    if not bn_act:
        out2d = pl.pallas_call(
            _conv_act_kernel,
            out_shape=jax.ShapeDtypeStruct((mp, coutp), jnp.float32),
            grid=(n_tiles,),
            in_specs=[patches_spec, w_spec, vec_spec],
            out_specs=row_spec,
            compiler_params=comp_params,
            cost_estimate=pl.CostEstimate(
                flops=conv_flops, transcendentals=0,
                bytes_accessed=patch_bytes + w_bytes + out_bytes),
        )(patches_p, w2d, b2d)
    elif _use_recompute(mp, k, coutp):
        # --- Recompute strategy: never round-trip the f32 conv through HBM ---
        # Pass 1: per-tile partial sums / sums-of-squares only.
        psum, psq = pl.pallas_call(
            functools.partial(_stats_kernel, m_valid=m),
            out_shape=(
                jax.ShapeDtypeStruct((n_tiles * SUBLANE, coutp), jnp.float32),
                jax.ShapeDtypeStruct((n_tiles * SUBLANE, coutp), jnp.float32),
            ),
            grid=(n_tiles,),
            in_specs=[patches_spec, w_spec],
            out_specs=(stat_spec, stat_spec),
            compiler_params=comp_params,
            cost_estimate=pl.CostEstimate(
                flops=conv_flops, transcendentals=0,
                bytes_accessed=patch_bytes + w_bytes + stat_bytes),
        )(patches_p, w2d)

        # Tiny XLA combine: exact batch statistics over the full (unpadded) M,
        # folded once into per-channel scale/shift.  The conv bias cancels
        # exactly under BatchNorm, so it never enters the hot loops.
        s = jnp.sum(psum, axis=0)                    # [Coutp]
        sq = jnp.sum(psq, axis=0)                    # [Coutp]
        mean = s / m
        var = jnp.maximum(sq / m - mean * mean, 0.0)
        g = jnp.pad(gamma.astype(jnp.float32), (0, coutp - cout))
        bt = jnp.pad(beta.astype(jnp.float32), (0, coutp - cout))
        scale_vec = g * jax.lax.rsqrt(var + BN_EPS)
        shift_vec = bt - mean * scale_vec
        scale = scale_vec.reshape(1, coutp)
        shift = shift_vec.reshape(1, coutp)

        # Pass 2: recompute conv on the MXU, apply scale/shift + LeakyReLU.
        out2d = pl.pallas_call(
            _conv_bn_act_kernel,
            out_shape=jax.ShapeDtypeStruct((mp, coutp), jnp.float32),
            grid=(n_tiles,),
            in_specs=[patches_spec, w_spec, vec_spec, vec_spec],
            out_specs=row_spec,
            compiler_params=comp_params,
            cost_estimate=pl.CostEstimate(
                flops=conv_flops + 3 * mp * coutp, transcendentals=0,
                bytes_accessed=patch_bytes + w_bytes + out_bytes),
        )(patches_p, w2d, scale, shift)
    else:
        # --- Store strategy (large K / MXU-bound): write f32 conv once ------
        conv, psum, psq = pl.pallas_call(
            functools.partial(_conv_stats_kernel, m_valid=m),
            out_shape=(
                jax.ShapeDtypeStruct((mp, coutp), jnp.float32),
                jax.ShapeDtypeStruct((n_tiles * SUBLANE, coutp), jnp.float32),
                jax.ShapeDtypeStruct((n_tiles * SUBLANE, coutp), jnp.float32),
            ),
            grid=(n_tiles,),
            in_specs=[patches_spec, w_spec],
            out_specs=(row_spec, stat_spec, stat_spec),
            compiler_params=comp_params,
            cost_estimate=pl.CostEstimate(
                flops=conv_flops, transcendentals=0,
                bytes_accessed=patch_bytes + w_bytes + out_bytes + stat_bytes),
        )(patches_p, w2d)

        s = jnp.sum(psum, axis=0)
        sq = jnp.sum(psq, axis=0)
        mean = s / m
        var = jnp.maximum(sq / m - mean * mean, 0.0)
        g = jnp.pad(gamma.astype(jnp.float32), (0, coutp - cout))
        bt = jnp.pad(beta.astype(jnp.float32), (0, coutp - cout))
        scale_vec = g * jax.lax.rsqrt(var + BN_EPS)
        shift_vec = bt - mean * scale_vec
        scale = scale_vec.reshape(1, coutp)
        shift = shift_vec.reshape(1, coutp)

        out2d = pl.pallas_call(
            _bn_act_kernel,
            out_shape=jax.ShapeDtypeStruct((mp, coutp), jnp.float32),
            grid=(n_tiles,),
            in_specs=[row_spec, vec_spec, vec_spec],
            out_specs=row_spec,
            compiler_params=comp_params,
            cost_estimate=pl.CostEstimate(
                flops=3 * mp * coutp, transcendentals=0,
                bytes_accessed=2 * out_bytes),
        )(conv, scale, shift)

    # [Mp, Coutp] -> valid [M, Cout] -> [N, OH, OW, Cout] -> NCHW.
    # TODO(synk): keep NHWC / [M, Cout] layout across chained CNNBlocks and
    # only convert to NCHW at model boundaries to save a transpose per layer.
    out2d = out2d[:m, :cout]
    return out2d.reshape(n, oh, ow, cout).transpose(0, 3, 1, 2)


# ---------------------------------------------------------------------------
# Reference + test
# ---------------------------------------------------------------------------


def _reference(x, weight, bias, gamma, beta, stride, padding, bn_act):
    # Mirror the kernel's bf16 operand rounding (f32 accumulation) so the
    # comparison isolates the kernel math, not the mixed-precision choice.
    xb = x.astype(jnp.bfloat16).astype(jnp.float32)
    wb = weight.astype(jnp.bfloat16).astype(jnp.float32)
    conv = jax.lax.conv_general_dilated(
        xb, wb,
        window_strides=(stride, stride),
        padding=((padding, padding), (padding, padding)),
        dimension_numbers=("NCHW", "OIHW", "NCHW"),
        precision=jax.lax.Precision.HIGHEST,
    ) + bias.reshape(1, -1, 1, 1)
    if bn_act:
        mean = jnp.mean(conv, axis=(0, 2, 3), keepdims=True)
        var = jnp.mean((conv - mean) ** 2, axis=(0, 2, 3), keepdims=True)
        conv = gamma.reshape(1, -1, 1, 1) * (conv - mean) * jax.lax.rsqrt(
            var + BN_EPS) + beta.reshape(1, -1, 1, 1)
    return jnp.where(conv > 0, conv, NEG_SLOPE * conv)


if __name__ == "__main__":
    # CNNBlock(in_channels=4, out_channels=8, kernel_size=3, stride=1, padding=1)
    N, CIN, H, W = 2, 4, 16, 16
    COUT, KS, STRIDE, PAD = 8, 3, 1, 1

    key = jax.random.PRNGKey(0)
    kx, kw_, kb = jax.random.split(key, 3)
    x = jax.random.normal(kx, (N, CIN, H, W), dtype=jnp.float32)
    fan_in = CIN * KS * KS
    bound = 1.0 / (fan_in ** 0.5)
    weight = jax.random.uniform(kw_, (COUT, CIN, KS, KS), jnp.float32,
                                -bound, bound)
    bias = jax.random.uniform(kb, (COUT,), jnp.float32, -bound, bound)
    gamma = jnp.ones((COUT,), jnp.float32)   # PyTorch BatchNorm2d default
    beta = jnp.zeros((COUT,), jnp.float32)

    # bn_act=True path (Conv + BN(train stats) + LeakyReLU)
    out = cnn_block_forward(x, weight, bias, gamma, beta,
                            kernel_size=KS, stride=STRIDE, padding=PAD,
                            bn_act=True)
    out = jax.block_until_ready(out)
    ref = _reference(x, weight, bias, gamma, beta, STRIDE, PAD, True)
    assert out.shape == (N, COUT, H, W)
    assert jnp.allclose(out, ref, atol=1e-3, rtol=1e-3)

    # bn_act=False path (Conv + LeakyReLU)
    out2 = cnn_block_forward(x, weight, bias, gamma, beta,
                             kernel_size=KS, stride=STRIDE, padding=PAD,
                             bn_act=False)
    out2 = jax.block_until_ready(out2)
    ref2 = _reference(x, weight, bias, gamma, beta, STRIDE, PAD, False)
    assert jnp.allclose(out2, ref2, atol=1e-3, rtol=1e-3)

    print("KERNEL_OK")
</pallas_src>

<mosaic_0001>
module attributes {stable_mosaic.version = 11 : i64} {
  func.func @_conv_bn_act_kernel(%arg0: i32, %arg1: memref<512x36xbf16, #tpu.memory_space<vmem>>, %arg2: memref<36x128xbf16, #tpu.memory_space<vmem>>, %arg3: memref<1x128xf32, #tpu.memory_space<vmem>>, %arg4: memref<1x128xf32, #tpu.memory_space<vmem>>, %arg5: memref<512x128xf32, #tpu.memory_space<vmem>>) attributes {dimension_semantics = [#tpu.dimension_semantics<parallel>], iteration_bounds = array<i64: 1>, scalar_prefetch = 0 : i64, scratch_operands = 0 : i64, tpu.core_type = #tpu.core_type<tc>, window_params = [{transform_indices = @transform_0, window_bounds = array<i64: 512, 36>}, {pipeline_mode = #tpu.pipeline_mode<synchronous>, transform_indices = @transform_1, window_bounds = array<i64: 36, 128>}, {pipeline_mode = #tpu.pipeline_mode<synchronous>, transform_indices = @transform_2, window_bounds = array<i64: 1, 128>}, {pipeline_mode = #tpu.pipeline_mode<synchronous>, transform_indices = @transform_3, window_bounds = array<i64: 1, 128>}, {transform_indices = @transform_4, window_bounds = array<i64: 512, 128>}]} {
    %c0 = arith.constant 0 : index
    %c0_0 = arith.constant 0 : index
    %0 = vector.load %arg1[%c0, %c0_0] : memref<512x36xbf16, #tpu.memory_space<vmem>>, vector<512x36xbf16>
    %c0_1 = arith.constant 0 : index
    %c0_2 = arith.constant 0 : index
    %1 = vector.load %arg2[%c0_1, %c0_2] : memref<36x128xbf16, #tpu.memory_space<vmem>>, vector<36x128xbf16>
    %cst = arith.constant dense<0.000000e+00> : vector<512x128xf32>
    %2 = tpu.matmul %0, %1, %cst {dimension_numbers = #tpu.dot_dimension_numbers<[1], [0], [0], [1], [0, 0, 1, 1], [], []>} : vector<512x36xbf16>, vector<36x128xbf16>, vector<512x128xf32> -> vector<512x128xf32>
    %c0_3 = arith.constant 0 : index
    %c0_4 = arith.constant 0 : index
    %3 = vector.load %arg3[%c0_3, %c0_4] : memref<1x128xf32, #tpu.memory_space<vmem>>, vector<1x128xf32>
    %4 = vector.broadcast %3 : vector<1x128xf32> to vector<512x128xf32>
    %5 = arith.mulf %2, %4 : vector<512x128xf32>
    %c0_5 = arith.constant 0 : index
    %c0_6 = arith.constant 0 : index
    %6 = vector.load %arg4[%c0_5, %c0_6] : memref<1x128xf32, #tpu.memory_space<vmem>>, vector<1x128xf32>
    %7 = vector.broadcast %6 : vector<1x128xf32> to vector<512x128xf32>
    %8 = arith.addf %5, %7 : vector<512x128xf32>
    %cst_7 = arith.constant 0.000000e+00 : f32
    %9 = vector.broadcast %cst_7 : f32 to vector<512x128xf32>
    %10 = arith.cmpf ogt, %8, %9 : vector<512x128xf32>
    %cst_8 = arith.constant 1.000000e-01 : f32
    %11 = vector.broadcast %cst_8 : f32 to vector<512x128xf32>
    %12 = arith.mulf %11, %8 : vector<512x128xf32>
    %13 = arith.select %10, %8, %12 : vector<512x128xi1>, vector<512x128xf32>
    %c0_9 = arith.constant 0 : index
    %c0_10 = arith.constant 0 : index
    %14 = vector.load %arg5[%c0_9, %c0_10] : memref<512x128xf32, #tpu.memory_space<vmem>>, vector<512x128xf32>
    tpu.vector_store %arg5[%c0_9, %c0_10], %13 {strides = array<i32>} : memref<512x128xf32, #tpu.memory_space<vmem>>, vector<512x128xf32>,
    return
  }
  func.func @transform_0(%arg0: i32) -> (i32, i32) {
    %c0_i32 = arith.constant 0 : i32
    %c0_i32_0 = arith.constant 0 : i32
    return %arg0, %c0_i32 : i32, i32
  }
  func.func @transform_1(%arg0: i32) -> (i32, i32) {
    %c0_i32 = arith.constant 0 : i32
    %c0_i32_0 = arith.constant 0 : i32
    %c0_i32_1 = arith.constant 0 : i32
    return %c0_i32, %c0_i32_0 : i32, i32
  }
  func.func @transform_2(%arg0: i32) -> (i32, i32) {
    %c0_i32 = arith.constant 0 : i32
    %c0_i32_0 = arith.constant 0 : i32
    %c0_i32_1 = arith.constant 0 : i32
    return %c0_i32, %c0_i32_0 : i32, i32
  }
  func.func @transform_3(%arg0: i32) -> (i32, i32) {
    %c0_i32 = arith.constant 0 : i32
    %c0_i32_0 = arith.constant 0 : i32
    %c0_i32_1 = arith.constant 0 : i32
    return %c0_i32, %c0_i32_0 : i32, i32
  }
  func.func @transform_4(%arg0: i32) -> (i32, i32) {
    %c0_i32 = arith.constant 0 : i32
    %c0_i32_0 = arith.constant 0 : i32
    return %arg0, %c0_i32 : i32, i32
  }
}

module attributes {stable_mosaic.version = 11 : i64} {
  func.func @_stats_kernel(%arg0: i32, %arg1: memref<512x36xbf16, #tpu.memory_space<vmem>>, %arg2: memref<36x128xbf16, #tpu.memory_space<vmem>>, %arg3: memref<8x128xf32, #tpu.memory_space<vmem>>, %arg4: memref<8x128xf32, #tpu.memory_space<vmem>>) attributes {dimension_semantics = [#tpu.dimension_semantics<parallel>], iteration_bounds = array<i64: 1>, scalar_prefetch = 0 : i64, scratch_operands = 0 : i64, tpu.core_type = #tpu.core_type<tc>, window_params = [{transform_indices = @transform_0, window_bounds = array<i64: 512, 36>}, {pipeline_mode = #tpu.pipeline_mode<synchronous>, transform_indices = @transform_1, window_bounds = array<i64: 36, 128>}, {transform_indices = @transform_2, window_bounds = array<i64: 8, 128>}, {transform_indices = @transform_3, window_bounds = array<i64: 8, 128>}]} {
    %c0 = arith.constant 0 : index
    %c0_0 = arith.constant 0 : index
    %0 = vector.load %arg1[%c0, %c0_0] : memref<512x36xbf16, #tpu.memory_space<vmem>>, vector<512x36xbf16>
    %c0_1 = arith.constant 0 : index
    %c0_2 = arith.constant 0 : index
    %1 = vector.load %arg2[%c0_1, %c0_2] : memref<36x128xbf16, #tpu.memory_space<vmem>>, vector<36x128xbf16>
    %cst = arith.constant dense<0.000000e+00> : vector<512x128xf32>
    %2 = tpu.matmul %0, %1, %cst {dimension_numbers = #tpu.dot_dimension_numbers<[1], [0], [0], [1], [0, 0, 1, 1], [], []>} : vector<512x36xbf16>, vector<36x128xbf16>, vector<512x128xf32> -> vector<512x128xf32>
    %c512_i32 = arith.constant 512 : i32
    %3 = arith.muli %arg0, %c512_i32 : i32
    %4 = tpu.iota {dimensions = array<i32: 0>} : vector<512x128xi32>
    %5 = vector.broadcast %3 : i32 to vector<512x128xi32>
    %6 = arith.addi %5, %4 : vector<512x128xi32>
    %c512_i32_3 = arith.constant 512 : i32
    %7 = vector.broadcast %c512_i32_3 : i32 to vector<512x128xi32>
    %8 = arith.cmpi slt, %6, %7 : vector<512x128xi32>
    %cst_4 = arith.constant 0.000000e+00 : f32
    %9 = vector.broadcast %cst_4 : f32 to vector<512x128xf32>
    %10 = arith.select %8, %2, %9 : vector<512x128xi1>, vector<512x128xf32>
    %11 = vector.shape_cast %10 : vector<512x128xf32> to vector<64x8x128xf32>
    %cst_5 = arith.constant dense<0.000000e+00> : vector<8x128xf32>
    %12 = vector.multi_reduction <add>, %11, %cst_5 [0] : vector<64x8x128xf32> to vector<8x128xf32>
    %c0_6 = arith.constant 0 : index
    %c0_7 = arith.constant 0 : index
    %13 = vector.load %arg3[%c0_6, %c0_7] : memref<8x128xf32, #tpu.memory_space<vmem>>, vector<8x128xf32>
    tpu.vector_store %arg3[%c0_6, %c0_7], %12 {strides = array<i32>} : memref<8x128xf32, #tpu.memory_space<vmem>>, vector<8x128xf32>,
    %14 = arith.mulf %11, %11 : vector<64x8x128xf32>
    %cst_8 = arith.constant dense<0.000000e+00> : vector<8x128xf32>
    %15 = vector.multi_reduction <add>, %14, %cst_8 [0] : vector<64x8x128xf32> to vector<8x128xf32>
    %c0_9 = arith.constant 0 : index
    %c0_10 = arith.constant 0 : index
    %16 = vector.load %arg4[%c0_9, %c0_10] : memref<8x128xf32, #tpu.memory_space<vmem>>, vector<8x128xf32>
    tpu.vector_store %arg4[%c0_9, %c0_10], %15 {strides = array<i32>} : memref<8x128xf32, #tpu.memory_space<vmem>>, vector<8x128xf32>,
    return
  }
  func.func @transform_0(%arg0: i32) -> (i32, i32) {
    %c0_i32 = arith.constant 0 : i32
    %c0_i32_0 = arith.constant 0 : i32
    return %arg0, %c0_i32 : i32, i32
  }
  func.func @transform_1(%arg0: i32) -> (i32, i32) {
    %c0_i32 = arith.constant 0 : i32
    %c0_i32_0 = arith.constant 0 : i32
    %c0_i32_1 = arith.constant 0 : i32
    return %c0_i32, %c0_i32_0 : i32, i32
  }
  func.func @transform_2(%arg0: i32) -> (i32, i32) {
    %c0_i32 = arith.constant 0 : i32
    %c0_i32_0 = arith.constant 0 : i32
    return %arg0, %c0_i32 : i32, i32
  }
  func.func @transform_3(%arg0: i32) -> (i32, i32) {
    %c0_i32 = arith.constant 0 : i32
    %c0_i32_0 = arith.constant 0 : i32
    return %arg0, %c0_i32 : i32, i32
  }
}

</mosaic_0001>

<llo_original>
// kernel: cnn_block_forward.2
$region0: #{cnn_block_forward.2}
  #allocation0 [shape = 'u32[]', space=smem, size = 0x4, offset = 0x4, fixed_abs, tag = 'smem constant byte address 0x4 - core index']
  #allocation1 [shape = 'u32[144,128]{1,0:T(1,128)}', space=vmem, size = 0x12000, scoped, tag = 'internal scratch']
  %s0 = inlined_call_operand.vmem [shape: bf16[512,36], index: 0, kind: input, shape index: {}]
  %s1 = inlined_call_operand.vmem [shape: bf16[36,128], index: 1, kind: input, shape index: {}]
  %s2 = inlined_call_operand.vmem [shape: f32[8,128], index: 2, kind: output, shape index: {0}]
  %s3 = inlined_call_operand.vmem [shape: f32[8,128], index: 3, kind: output, shape index: {1}]
  %4 = xla_tuple %s2, %s3
  %s5 = sld [smem:[#allocation0]]
  $region26: #{cnn_block_forward.2} parent=0
    _
  %s7 = ssub.s32 1, %s5
  %s8 = scalar_select 0, %s7, %s5
  // Predicated region
  $region2: #{cnn_block_forward.2} parent=0 // pred_check
    _
  $region3: #{cnn_block_forward.2} parent=0 // pred_check_branch
    %10 = sbr.rel (0) target = $region5
  $region4: #{cnn_block_forward.2} parent=0 // pred_region
    _
  $region5: #{cnn_block_forward.2} parent=0 // pred_fallthru
    _
  // Predicated region
  $region6: #{cnn_block_forward.2} parent=0 // pred_check
    _
  $region7: #{cnn_block_forward.2} parent=0 // pred_check_branch
    %12 = sbr.rel (0) target = $region9
  $region8: #{cnn_block_forward.2} parent=0 // pred_region
    _
  $region9: #{cnn_block_forward.2} parent=0 // pred_fallthru
    _
  %v14 = vld [vmem:[%s0] sm:$0xf]
  %v15 = vld [vmem:[%s0 + $0x4] sm:$0xf]
  %v16 = vld [vmem:[%s0 + $0x8] sm:$0xf]
  %v17 = vld [vmem:[%s0 + $0xc] sm:$0xf]
  %v18 = vld [vmem:[%s0 + $0x10] sm:$0xf]
  %v19 = vld [vmem:[%s0 + $0x14] sm:$0xf]
  %v20 = vld [vmem:[%s0 + $0x18] sm:$0xf]
  %v21 = vld [vmem:[%s0 + $0x1c] sm:$0xf]
  %v22 = vld [vmem:[%s0 + $0x20] sm:$0xf]
  %v23 = vld [vmem:[%s0 + $0x24] sm:$0xf]
  %v24 = vld [vmem:[%s0 + $0x28] sm:$0xf]
  %v25 = vld [vmem:[%s0 + $0x2c] sm:$0xf]
  %v26 = vld [vmem:[%s0 + $0x30] sm:$0xf]
  %v27 = vld [vmem:[%s0 + $0x34] sm:$0xf]
  %v28 = vld [vmem:[%s0 + $0x38] sm:$0xf]
  %v29 = vld [vmem:[%s0 + $0x3c] sm:$0xf]
  %v30 = vld [vmem:[%s0 + $0x40] sm:$0xf]
  %v31 = vld [vmem:[%s0 + $0x44] sm:$0xf]
  %v32 = vld [vmem:[%s0 + $0x48] sm:$0xf]
  %v33 = vld [vmem:[%s0 + $0x4c] sm:$0xf]
  %v34 = vld [vmem:[%s0 + $0x50] sm:$0xf]
  %v35 = vld [vmem:[%s0 + $0x54] sm:$0xf]
  %v36 = vld [vmem:[%s0 + $0x58] sm:$0xf]
  %v37 = vld [vmem:[%s0 + $0x5c] sm:$0xf]
  %v38 = vld [vmem:[%s0 + $0x60] sm:$0xf]
  %v39 = vld [vmem:[%s0 + $0x64] sm:$0xf]
  %v40 = vld [vmem:[%s0 + $0x68] sm:$0xf]
  %v41 = vld [vmem:[%s0 + $0x6c] sm:$0xf]
  %v42 = vld [vmem:[%s0 + $0x70] sm:$0xf]
  %v43 = vld [vmem:[%s0 + $0x74] sm:$0xf]
  %v44 = vld [vmem:[%s0 + $0x78] sm:$0xf]
  %v45 = vld [vmem:[%s0 + $0x7c] sm:$0xf]
  %v46 = vld [vmem:[%s0 + $0x80] sm:$0xf]
  %v47 = vld [vmem:[%s0 + $0x84] sm:$0xf]
  %v48 = vld [vmem:[%s0 + $0x88] sm:$0xf]
  %v49 = vld [vmem:[%s0 + $0x8c] sm:$0xf]
  %v50 = vld [vmem:[%s0 + $0x90] sm:$0xf]
  %v51 = vld [vmem:[%s0 + $0x94] sm:$0xf]
  %v52 = vld [vmem:[%s0 + $0x98] sm:$0xf]
  %v53 = vld [vmem:[%s0 + $0x9c] sm:$0xf]
  %v54 = vld [vmem:[%s0 + $0xa0] sm:$0xf]
  %v55 = vld [vmem:[%s0 + $0xa4] sm:$0xf]
  %v56 = vld [vmem:[%s0 + $0xa8] sm:$0xf]
  %v57 = vld [vmem:[%s0 + $0xac] sm:$0xf]
  %v58 = vld [vmem:[%s0 + $0xb0] sm:$0xf]
  %v59 = vld [vmem:[%s0 + $0xb4] sm:$0xf]
  %v60 = vld [vmem:[%s0 + $0xb8] sm:$0xf]
  %v61 = vld [vmem:[%s0 + $0xbc] sm:$0xf]
  %v62 = vld [vmem:[%s0 + $0xc0] sm:$0xf]
  %v63 = vld [vmem:[%s0 + $0xc4] sm:$0xf]
  %v64 = vld [vmem:[%s0 + $0xc8] sm:$0xf]
  %v65 = vld [vmem:[%s0 + $0xcc] sm:$0xf]
  %v66 = vld [vmem:[%s0 + $0xd0] sm:$0xf]
  %v67 = vld [vmem:[%s0 + $0xd4] sm:$0xf]
  %v68 = vld [vmem:[%s0 + $0xd8] sm:$0xf]
  %v69 = vld [vmem:[%s0 + $0xdc] sm:$0xf]
  %v70 = vld [vmem:[%s0 + $0xe0] sm:$0xf]
  %v71 = vld [vmem:[%s0 + $0xe4] sm:$0xf]
  %v72 = vld [vmem:[%s0 + $0xe8] sm:$0xf]
  %v73 = vld [vmem:[%s0 + $0xec] sm:$0xf]
  %v74 = vld [vmem:[%s0 + $0xf0] sm:$0xf]
  %v75 = vld [vmem:[%s0 + $0xf4] sm:$0xf]
  %v76 = vld [vmem:[%s0 + $0xf8] sm:$0xf]
  %v77 = vld [vmem:[%s0 + $0xfc] sm:$0xf]
  %v78 = vld [vmem:[%s1] sm:$0xf]
  %v79 = vld [vmem:[%s1 + $0x4] sm:$0xf]
  %v80 = vld [vmem:[%s1 + $0x8] sm:$0xf]
  %v81 = vld [vmem:[%s1 + $0xc] sm:$0xf]
  %v82 = vld [vmem:[%s1 + $0x10] sm:$0x3]
  %v147 = vunpack.c.l.b16 %v14
  %v148 = vunpack.c.l.b16 %v15
  %v149 = vunpack.c.l.b16 %v16
  %v150 = vunpack.c.l.b16 %v17
  %v151 = vunpack.c.l.b16 %v18
  %v152 = vunpack.c.l.b16 %v19
  %v153 = vunpack.c.l.b16 %v20
  %v154 = vunpack.c.l.b16 %v21
  %v155 = vunpack.c.l.b16 %v22
  %v156 = vunpack.c.l.b16 %v23
  %v157 = vunpack.c.l.b16 %v24
  %v158 = vunpack.c.l.b16 %v25
  %v159 = vunpack.c.l.b16 %v26
  %v160 = vunpack.c.l.b16 %v27
  %v161 = vunpack.c.l.b16 %v28
  %v162 = vunpack.c.l.b16 %v29
  %v163 = vunpack.c.l.b16 %v30
  %v164 = vunpack.c.l.b16 %v31
  %v165 = vunpack.c.l.b16 %v32
  %v166 = vunpack.c.l.b16 %v33
  %v167 = vunpack.c.l.b16 %v34
  %v168 = vunpack.c.l.b16 %v35
  %v169 = vunpack.c.l.b16 %v36
  %v170 = vunpack.c.l.b16 %v37
  %v171 = vunpack.c.l.b16 %v38
  %v172 = vunpack.c.l.b16 %v39
  %v173 = vunpack.c.l.b16 %v40
  %v174 = vunpack.c.l.b16 %v41
  %v175 = vunpack.c.l.b16 %v42
  %v176 = vunpack.c.l.b16 %v43
  %v177 = vunpack.c.l.b16 %v44
  %v178 = vunpack.c.l.b16 %v45
  %v179 = vunpack.c.l.b16 %v46
  %v180 = vunpack.c.l.b16 %v47
  %v181 = vunpack.c.l.b16 %v48
  %v182 = vunpack.c.l.b16 %v49
  %v183 = vunpack.c.l.b16 %v50
  %v184 = vunpack.c.l.b16 %v51
  %v185 = vunpack.c.l.b16 %v52
  %v186 = vunpack.c.l.b16 %v53
  %v187 = vunpack.c.l.b16 %v54
  %v188 = vunpack.c.l.b16 %v55
  %v189 = vunpack.c.l.b16 %v56
  %v190 = vunpack.c.l.b16 %v57
  %v191 = vunpack.c.l.b16 %v58
  %v192 = vunpack.c.l.b16 %v59
  %v193 = vunpack.c.l.b16 %v60
  %v194 = vunpack.c.l.b16 %v61
  %v195 = vunpack.c.l.b16 %v62
  %v196 = vunpack.c.l.b16 %v63
  %v197 = vunpack.c.l.b16 %v64
  %v198 = vunpack.c.l.b16 %v65
  %v199 = vunpack.c.l.b16 %v66
  %v200 = vunpack.c.l.b16 %v67
  %v201 = vunpack.c.l.b16 %v68
  %v202 = vunpack.c.l.b16 %v69
  %v203 = vunpack.c.l.b16 %v70
  %v204 = vunpack.c.l.b16 %v71
  %v205 = vunpack.c.l.b16 %v72
  %v206 = vunpack.c.l.b16 %v73
  %v207 = vunpack.c.l.b16 %v74
  %v208 = vunpack.c.l.b16 %v75
  %v209 = vunpack.c.l.b16 %v76
  %v210 = vunpack.c.l.b16 %v77
  %v211 = vpack.c.b16 %v148, %v147
  %v212 = vpack.c.b16 %v150, %v149
  %v213 = vpack.c.b16 %v152, %v151
  %v214 = vpack.c.b16 %v154, %v153
  %v215 = vpack.c.b16 %v156, %v155
  %v216 = vpack.c.b16 %v158, %v157
  %v217 = vpack.c.b16 %v160, %v159
  %v218 = vpack.c.b16 %v162, %v161
  %v219 = vpack.c.b16 %v164, %v163
  %v220 = vpack.c.b16 %v166, %v165
  %v221 = vpack.c.b16 %v168, %v167
  %v222 = vpack.c.b16 %v170, %v169
  %v223 = vpack.c.b16 %v172, %v171
  %v224 = vpack.c.b16 %v174, %v173
  %v225 = vpack.c.b16 %v176, %v175
  %v226 = vpack.c.b16 %v178, %v177
  %v227 = vpack.c.b16 %v180, %v179
  %v228 = vpack.c.b16 %v182, %v181
  %v229 = vpack.c.b16 %v184, %v183
  %v230 = vpack.c.b16 %v186, %v185
  %v231 = vpack.c.b16 %v188, %v187
  %v232 = vpack.c.b16 %v190, %v189
  %v233 = vpack.c.b16 %v192, %v191
  %v234 = vpack.c.b16 %v194, %v193
  %v235 = vpack.c.b16 %v196, %v195
  %v236 = vpack.c.b16 %v198, %v197
  %v237 = vpack.c.b16 %v200, %v199
  %v238 = vpack.c.b16 %v202, %v201
  %v239 = vpack.c.b16 %v204, %v203
  %v240 = vpack.c.b16 %v206, %v205
  %v241 = vpack.c.b16 %v208, %v207
  %v242 = vpack.c.b16 %v210, %v209
  %v248 = vunpack.c.l.b16 %v78
  %v249 = vunpack.c.l.b16 %v79
  %v250 = vunpack.c.l.b16 %v80
  %v251 = vunpack.c.l.b16 %v81
  %v252 = vunpack.c.l.b16 %v82
  %v253 = vpack.c.b16 %v249, %v248
  %v254 = vpack.c.b16 %v251, %v250
  %v255 = vpack.c.b16 %v252, %v252
  %vm258 = vcmask 293888
  %v260 = vsel %vm258, %v211, 0
  %v263 = vsel %vm258, %v212, 0
  %v266 = vsel %vm258, %v213, 0
  %v269 = vsel %vm258, %v214, 0
  %v272 = vsel %vm258, %v215, 0
  %v275 = vsel %vm258, %v216, 0
  %v278 = vsel %vm258, %v217, 0
  %v281 = vsel %vm258, %v218, 0
  %v284 = vsel %vm258, %v219, 0
  %v287 = vsel %vm258, %v220, 0
  %v290 = vsel %vm258, %v221, 0
  %v293 = vsel %vm258, %v222, 0
  %v296 = vsel %vm258, %v223, 0
  %v299 = vsel %vm258, %v224, 0
  %v302 = vsel %vm258, %v225, 0
  %v305 = vsel %vm258, %v226, 0
  %v308 = vsel %vm258, %v227, 0
  %v311 = vsel %vm258, %v228, 0
  %v314 = vsel %vm258, %v229, 0
  %v317 = vsel %vm258, %v230, 0
  %v320 = vsel %vm258, %v231, 0
  %v323 = vsel %vm258, %v232, 0
  %v326 = vsel %vm258, %v233, 0
  %v329 = vsel %vm258, %v234, 0
  %v332 = vsel %vm258, %v235, 0
  %v335 = vsel %vm258, %v236, 0
  %v338 = vsel %vm258, %v237, 0
  %v341 = vsel %vm258, %v238, 0
  %v344 = vsel %vm258, %v239, 0
  %v347 = vsel %vm258, %v240, 0
  %v350 = vsel %vm258, %v241, 0
  %v353 = vsel %vm258, %v242, 0
  %vm355 = vcmask 1041408
  %v357 = vsel %vm355, %v255, 0
  %359 = vmatprep.subr.bf16.mxu0 0
  %360 = vmatpush1.bf16.msra.mxu0 %v253
  %361 = vmatprep.subr.bf16.mxu0 0
  %362 = vmatpush1.bf16.msra.mxu0 %v254
  %363 = vmatprep.subr.bf16.mxu0 0
  %364 = vmatpush1.bf16.msra.mxu0 %v357
  %365 = vmatprep.subr.bf16.mxu0 0
  %366 = vmatpush1.bf16.msra.mxu0 0
  %367 = vmatprep.subr.bf16.mxu0 0
  %368 = vmatpush1.bf16.msra.mxu0 0
  %369 = vmatprep.subr.bf16.mxu0 0
  %370 = vmatpush1.bf16.msra.mxu0 0
  %371 = vmatprep.subr.bf16.mxu0 0
  %372 = vmatpush1.bf16.msra.mxu0 0
  %373 = vmatprep.subr.bf16.mxu0 0
  %374 = vmatpush1.bf16.msra.mxu0 0
  %375 = vmatprep.subr.bf16.mxu0 0
  %376 = vmatpush1.bf16.msra.mxu0 0
  %377 = vmatprep.subr.bf16.mxu0 0
  %378 = vmatpush1.bf16.msra.mxu0 0
  %379 = vmatprep.subr.bf16.mxu0 0
  %380 = vmatpush1.bf16.msra.mxu0 0
  %381 = vmatprep.subr.bf16.mxu0 0
  %382 = vmatpush1.bf16.msra.mxu0 0
  %383 = vmatprep.subr.bf16.mxu0 0
  %384 = vmatpush1.bf16.msra.mxu0 0
  %385 = vmatprep.subr.bf16.mxu0 0
  %386 = vmatpush1.bf16.msra.mxu0 0
  %387 = vmatprep.subr.bf16.mxu0 0
  %388 = vmatpush1.bf16.msra.mxu0 0
  %389 = vmatprep.subr.bf16.mxu0 0
  %390 = vmatpush1.bf16.msra.mxu0 0
  %391 = vmatprep.mubr.bf16.mxu0 0
  %392 = vmatmul.mubr.bf16.gmra.mrb[0].mxu0 %v260
  %v393 = vpop.f32.mrb[0].mxu0
  %v394 = vadd.f32 0.0, %v393
  %v395 = vpop.f32.mrb[0].mxu0
  %v396 = vpop.f32.mrb[0].mxu0
  %v397 = vadd.f32 0.0, %v396
  %v398 = vpop.f32.mrb[0].mxu0
  %399 = vmatprep.mubr.bf16.mxu0 0
  %400 = vmatmul.mubr.bf16.gmra.mrb[0].mxu0 %v263
  %v401 = vpop.f32.mrb[0].mxu0
  %v402 = vadd.f32 0.0, %v401
  %v403 = vpop.f32.mrb[0].mxu0
  %v404 = vpop.f32.mrb[0].mxu0
  %v405 = vadd.f32 0.0, %v404
  %v406 = vpop.f32.mrb[0].mxu0
  %407 = vmatprep.mubr.bf16.mxu0 0
  %408 = vmatmul.mubr.bf16.gmra.mrb[0].mxu0 %v266
  %v409 = vpop.f32.mrb[0].mxu0
  %v410 = vadd.f32 0.0, %v409
  %v411 = vpop.f32.mrb[0].mxu0
  %v412 = vpop.f32.mrb[0].mxu0
  %v413 = vadd.f32 0.0, %v412
  %v414 = vpop.f32.mrb[0].mxu0
  %415 = vmatprep.mubr.bf16.mxu0 0
  %416 = vmatmul.mubr.bf16.gmra.mrb[0].mxu0 %v269
  %v417 = vpop.f32.mrb[0].mxu0
  %v418 = vadd.f32 0.0, %v417
  %v419 = vpop.f32.mrb[0].mxu0
  %v420 = vpop.f32.mrb[0].mxu0
  %v421 = vadd.f32 0.0, %v420
  %v422 = vpop.f32.mrb[0].mxu0
  %423 = vmatprep.mubr.bf16.mxu0 0
  %424 = vmatmul.mubr.bf16.gmra.mrb[0].mxu0 %v272
  %v425 = vpop.f32.mrb[0].mxu0
  %v426 = vadd.f32 0.0, %v425
  %v427 = vpop.f32.mrb[0].mxu0
  %v428 = vpop.f32.mrb[0].mxu0
  %v429 = vadd.f32 0.0, %v428
  %v430 = vpop.f32.mrb[0].mxu0
  %431 = vmatprep.mubr.bf16.mxu0 0
  %432 = vmatmul.mubr.bf16.gmra.mrb[0].mxu0 %v275
  %v433 = vpop.f32.mrb[0].mxu0
  %v434 = vadd.f32 0.0, %v433
  %v435 = vpop.f32.mrb[0].mxu0
  %v436 = vpop.f32.mrb[0].mxu0
  %v437 = vadd.f32 0.0, %v436
  %v438 = vpop.f32.mrb[0].mxu0
  %439 = vmatprep.mubr.bf16.mxu0 0
  %440 = vmatmul.mubr.bf16.gmra.mrb[0].mxu0 %v278
  %v441 = vpop.f32.mrb[0].mxu0
  %v442 = vadd.f32 0.0, %v441
  %v443 = vpop.f32.mrb[0].mxu0
  %v444 = vpop.f32.mrb[0].mxu0
  %v445 = vadd.f32 0.0, %v444
  %v446 = vpop.f32.mrb[0].mxu0
  %447 = vmatprep.mubr.bf16.mxu0 0
  %448 = vmatmul.mubr.bf16.gmra.mrb[0].mxu0 %v281
  %v449 = vpop.f32.mrb[0].mxu0
  %v450 = vadd.f32 0.0, %v449
  %v451 = vpop.f32.mrb[0].mxu0
  %v452 = vpop.f32.mrb[0].mxu0
  %v453 = vadd.f32 0.0, %v452
  %v454 = vpop.f32.mrb[0].mxu0
  %455 = vmatprep.mubr.bf16.mxu0 0
  %456 = vmatmul.mubr.bf16.gmra.mrb[0].mxu0 %v284
  %v457 = vpop.f32.mrb[0].mxu0
  %v458 = vadd.f32 0.0, %v457
  %v459 = vpop.f32.mrb[0].mxu0
  %v460 = vpop.f32.mrb[0].mxu0
  %v461 = vadd.f32 0.0, %v460
  %v462 = vpop.f32.mrb[0].mxu0
  %463 = vmatprep.mubr.bf16.mxu0 0
  %464 = vmatmul.mubr.bf16.gmra.mrb[0].mxu0 %v287
  %v465 = vpop.f32.mrb[0].mxu0
  %v466 = vadd.f32 0.0, %v465
  %v467 = vpop.f32.mrb[0].mxu0
  %v468 = vpop.f32.mrb[0].mxu0
  %v469 = vadd.f32 0.0, %v468
  %v470 = vpop.f32.mrb[0].mxu0
  %471 = vmatprep.mubr.bf16.mxu0 0
  %472 = vmatmul.mubr.bf16.gmra.mrb[0].mxu0 %v290
  %v473 = vpop.f32.mrb[0].mxu0
  %v474 = vadd.f32 0.0, %v473
  %v475 = vpop.f32.mrb[0].mxu0
  %v476 = vpop.f32.mrb[0].mxu0
  %v477 = vadd.f32 0.0, %v476
  %v478 = vpop.f32.mrb[0].mxu0
  %479 = vmatprep.mubr.bf16.mxu0 0
  %480 = vmatmul.mubr.bf16.gmra.mrb[0].mxu0 %v293
  %v481 = vpop.f32.mrb[0].mxu0
  %v482 = vadd.f32 0.0, %v481
  %v483 = vpop.f32.mrb[0].mxu0
  %v484 = vpop.f32.mrb[0].mxu0
  %v485 = vadd.f32 0.0, %v484
  %v486 = vpop.f32.mrb[0].mxu0
  %487 = vmatprep.mubr.bf16.mxu0 0
  %488 = vmatmul.mubr.bf16.gmra.mrb[0].mxu0 %v296
  %v489 = vpop.f32.mrb[0].mxu0
  %v490 = vadd.f32 0.0, %v489
  %v491 = vpop.f32.mrb[0].mxu0
  %v492 = vpop.f32.mrb[0].mxu0
  %v493 = vadd.f32 0.0, %v492
  %v494 = vpop.f32.mrb[0].mxu0
  %495 = vmatprep.mubr.bf16.mxu0 0
  %496 = vmatmul.mubr.bf16.gmra.mrb[0].mxu0 %v299
  %v497 = vpop.f32.mrb[0].mxu0
  %v498 = vadd.f32 0.0, %v497
  %v499 = vpop.f32.mrb[0].mxu0
  %v500 = vpop.f32.mrb[0].mxu0
  %v501 = vadd.f32 0.0, %v500
  %v502 = vpop.f32.mrb[0].mxu0
  %503 = vmatprep.mubr.bf16.mxu0 0
  %504 = vmatmul.mubr.bf16.gmra.mrb[0].mxu0 %v302
  %v505 = vpop.f32.mrb[0].mxu0
  %v506 = vadd.f32 0.0, %v505
  %v507 = vpop.f32.mrb[0].mxu0
  %v508 = vpop.f32.mrb[0].mxu0
  %v509 = vadd.f32 0.0, %v508
  %v510 = vpop.f32.mrb[0].mxu0
  %511 = vmatprep.mubr.bf16.mxu0 0
  %512 = vmatmul.mubr.bf16.gmra.mrb[0].mxu0 %v305
  %v513 = vpop.f32.mrb[0].mxu0
  %v514 = vadd.f32 0.0, %v513
  %v515 = vpop.f32.mrb[0].mxu0
  %v516 = vpop.f32.mrb[0].mxu0
  %v517 = vadd.f32 0.0, %v516
  %v518 = vpop.f32.mrb[0].mxu0
  %519 = vmatprep.mubr.bf16.mxu0 0
  %520 = vmatmul.mubr.bf16.gmra.mrb[0].mxu0 %v308
  %v521 = vpop.f32.mrb[0].mxu0
  %v522 = vadd.f32 0.0, %v521
  %v523 = vpop.f32.mrb[0].mxu0
  %v524 = vpop.f32.mrb[0].mxu0
  %v525 = vadd.f32 0.0, %v524
  %v526 = vpop.f32.mrb[0].mxu0
  %527 = vmatprep.mubr.bf16.mxu0 0
  %528 = vmatmul.mubr.bf16.gmra.mrb[0].mxu0 %v311
  %v529 = vpop.f32.mrb[0].mxu0
  %v530 = vadd.f32 0.0, %v529
  %v531 = vpop.f32.mrb[0].mxu0
  %v532 = vpop.f32.mrb[0].mxu0
  %v533 = vadd.f32 0.0, %v532
  %v534 = vpop.f32.mrb[0].mxu0
  %535 = vmatprep.mubr.bf16.mxu0 0
  %536 = vmatmul.mubr.bf16.gmra.mrb[0].mxu0 %v314
  %v537 = vpop.f32.mrb[0].mxu0
  %v538 = vadd.f32 0.0, %v537
  %v539 = vpop.f32.mrb[0].mxu0
  %v540 = vpop.f32.mrb[0].mxu0
  %v541 = vadd.f32 0.0, %v540
  %v542 = vpop.f32.mrb[0].mxu0
  %543 = vmatprep.mubr.bf16.mxu0 0
  %544 = vmatmul.mubr.bf16.gmra.mrb[0].mxu0 %v317
  %v545 = vpop.f32.mrb[0].mxu0
  %v546 = vadd.f32 0.0, %v545
  %v547 = vpop.f32.mrb[0].mxu0
  %v548 = vpop.f32.mrb[0].mxu0
  %v549 = vadd.f32 0.0, %v548
  %v550 = vpop.f32.mrb[0].mxu0
  %551 = vmatprep.mubr.bf16.mxu0 0
  %552 = vmatmul.mubr.bf16.gmra.mrb[0].mxu0 %v320
  %v553 = vpop.f32.mrb[0].mxu0
  %v554 = vadd.f32 0.0, %v553
  %v555 = vpop.f32.mrb[0].mxu0
  %v556 = vpop.f32.mrb[0].mxu0
  %v557 = vadd.f32 0.0, %v556
  %v558 = vpop.f32.mrb[0].mxu0
  %559 = vmatprep.mubr.bf16.mxu0 0
  %560 = vmatmul.mubr.bf16.gmra.mrb[0].mxu0 %v323
  %v561 = vpop.f32.mrb[0].mxu0
  %v562 = vadd.f32 0.0, %v561
  %v563 = vpop.f32.mrb[0].mxu0
  %v564 = vpop.f32.mrb[0].mxu0
  %v565 = vadd.f32 0.0, %v564
  %v566 = vpop.f32.mrb[0].mxu0
  %567 = vmatprep.mubr.bf16.mxu0 0
  %568 = vmatmul.mubr.bf16.gmra.mrb[0].mxu0 %v326
  %v569 = vpop.f32.mrb[0].mxu0
  %v570 = vadd.f32 0.0, %v569
  %v571 = vpop.f32.mrb[0].mxu0
  %v572 = vpop.f32.mrb[0].mxu0
  %v573 = vadd.f32 0.0, %v572
  %v574 = vpop.f32.mrb[0].mxu0
  %575 = vmatprep.mubr.bf16.mxu0 0
  %576 = vmatmul.mubr.bf16.gmra.mrb[0].mxu0 %v329
  %v577 = vpop.f32.mrb[0].mxu0
  %v578 = vadd.f32 0.0, %v577
  %v579 = vpop.f32.mrb[0].mxu0
  %v580 = vpop.f32.mrb[0].mxu0
  %v581 = vadd.f32 0.0, %v580
  %v582 = vpop.f32.mrb[0].mxu0
  %583 = vmatprep.mubr.bf16.mxu0 0
  %584 = vmatmul.mubr.bf16.gmra.mrb[0].mxu0 %v332
  %v585 = vpop.f32.mrb[0].mxu0
  %v586 = vadd.f32 0.0, %v585
  %v587 = vpop.f32.mrb[0].mxu0
  %v588 = vpop.f32.mrb[0].mxu0
  %v589 = vadd.f32 0.0, %v588
  %v590 = vpop.f32.mrb[0].mxu0
  %591 = vmatprep.mubr.bf16.mxu0 0
  %592 = vmatmul.mubr.bf16.gmra.mrb[0].mxu0 %v335
  %v593 = vpop.f32.mrb[0].mxu0
  %v594 = vadd.f32 0.0, %v593
  %v595 = vpop.f32.mrb[0].mxu0
  %v596 = vpop.f32.mrb[0].mxu0
  %v597 = vadd.f32 0.0, %v596
  %v598 = vpop.f32.mrb[0].mxu0
  %599 = vmatprep.mubr.bf16.mxu0 0
  %600 = vmatmul.mubr.bf16.gmra.mrb[0].mxu0 %v338
  %v601 = vpop.f32.mrb[0].mxu0
  %v602 = vadd.f32 0.0, %v601
  %v603 = vpop.f32.mrb[0].mxu0
  %v604 = vpop.f32.mrb[0].mxu0
  %v605 = vadd.f32 0.0, %v604
  %v606 = vpop.f32.mrb[0].mxu0
  %607 = vmatprep.mubr.bf16.mxu0 0
  %608 = vmatmul.mubr.bf16.gmra.mrb[0].mxu0 %v341
  %v609 = vpop.f32.mrb[0].mxu0
  %v610 = vadd.f32 0.0, %v609
  %v611 = vpop.f32.mrb[0].mxu0
  %v612 = vpop.f32.mrb[0].mxu0
  %v613 = vadd.f32 0.0, %v612
  %v614 = vpop.f32.mrb[0].mxu0
  %615 = vmatprep.mubr.bf16.mxu0 0
  %616 = vmatmul.mubr.bf16.gmra.mrb[0].mxu0 %v344
  %v617 = vpop.f32.mrb[0].mxu0
  %v618 = vadd.f32 0.0, %v617
  %v619 = vpop.f32.mrb[0].mxu0
  %v620 = vpop.f32.mrb[0].mxu0
  %v621 = vadd.f32 0.0, %v620
  %v622 = vpop.f32.mrb[0].mxu0
  %623 = vmatprep.mubr.bf16.mxu0 0
  %624 = vmatmul.mubr.bf16.gmra.mrb[0].mxu0 %v347
  %v625 = vpop.f32.mrb[0].mxu0
  %v626 = vadd.f32 0.0, %v625
  %v627 = vpop.f32.mrb[0].mxu0
  %v628 = vpop.f32.mrb[0].mxu0
  %v629 = vadd.f32 0.0, %v628
  %v630 = vpop.f32.mrb[0].mxu0
  %631 = vmatprep.mubr.bf16.mxu0 0
  %632 = vmatmul.mubr.bf16.gmra.mrb[0].mxu0 %v350
  %v633 = vpop.f32.mrb[0].mxu0
  %v634 = vadd.f32 0.0, %v633
  %v635 = vpop.f32.mrb[0].mxu0
  %v636 = vpop.f32.mrb[0].mxu0
  %v637 = vadd.f32 0.0, %v636
  %v638 = vpop.f32.mrb[0].mxu0
  %639 = vmatprep.mubr.bf16.mxu0 0
  %640 = vmatmul.mubr.bf16.gmra.mrb[0].mxu0 %v353
  %v641 = vpop.f32.mrb[0].mxu0
  %v642 = vadd.f32 0.0, %v641
  %v643 = vpop.f32.mrb[0].mxu0
  %v644 = vpop.f32.mrb[0].mxu0
  %v645 = vadd.f32 0.0, %v644
  %v646 = vpop.f32.mrb[0].mxu0
  %647 = vdwg.mxu0
  %s648 = smul.u32 0, 512
  %v649 = vlaneseq
  %v650 = vshrl.u32 %v649, 7
  %v651 = vadd.s32 %v650, 8
  %v652 = vadd.s32 %v650, 16
  %v653 = vadd.s32 %v650, 24
  %v654 = vadd.s32 %v650, 32
  %v655 = vadd.s32 %v650, 40
  %v656 = vadd.s32 %v650, 48
  %v657 = vadd.s32 %v650, 56
  %v658 = vadd.s32 %v650, 64
  %v659 = vadd.s32 %v650, 72
  %v660 = vadd.s32 %v650, 80
  %v661 = vadd.s32 %v650, 88
  %v662 = vadd.s32 %v650, 96
  %v663 = vadd.s32 %v650, 104
  %v664 = vadd.s32 %v650, 112
  %v665 = vadd.s32 %v650, 120
  %v666 = vadd.s32 %v650, 128
  %v667 = vadd.s32 %v650, 136
  %v668 = vadd.s32 %v650, 144
  %v669 = vadd.s32 %v650, 152
  %v670 = vadd.s32 %v650, 160
  %v671 = vadd.s32 %v650, 168
  %v672 = vadd.s32 %v650, 176
  %v673 = vadd.s32 %v650, 184
  %v674 = vadd.s32 %v650, 192
  %v675 = vadd.s32 %v650, 200
  %v676 = vadd.s32 %v650, 208
  %v677 = vadd.s32 %v650, 216
  %v678 = vadd.s32 %v650, 224
  %v679 = vadd.s32 %v650, 232
  %v680 = vadd.s32 %v650, 240
  %v681 = vadd.s32 %v650, 248
  %v682 = vadd.s32 %v650, 256
  %v683 = vadd.s32 %v650, 264
  %v684 = vadd.s32 %v650, 272
  %v685 = vadd.s32 %v650, 280
  %v686 = vadd.s32 %v650, 288
  %v687 = vadd.s32 %v650, 296
  %v688 = vadd.s32 %v650, 304
  %v689 = vadd.s32 %v650, 312
  %v690 = vadd.s32 %v650, 320
  %v691 = vadd.s32 %v650, 328
  %v692 = vadd.s32 %v650, 336
  %v693 = vadd.s32 %v650, 344
  %v694 = vadd.s32 %v650, 352
  %v695 = vadd.s32 %v650, 360
  %v696 = vadd.s32 %v650, 368
  %v697 = vadd.s32 %v650, 376
  %v698 = vadd.s32 %v650, 384
  %v699 = vadd.s32 %v650, 392
  %v700 = vadd.s32 %v650, 400
  %v701 = vadd.s32 %v650, 408
  %v702 = vadd.s32 %v650, 416
  %v703 = vadd.s32 %v650, 424
  %v704 = vadd.s32 %v650, 432
  %v705 = vadd.s32 %v650, 440
  %v706 = vadd.s32 %v650, 448
  %v707 = vadd.s32 %v650, 456
  %v708 = vadd.s32 %v650, 464
  %v709 = vadd.s32 %v650, 472
  %v710 = vadd.s32 %v650, 480
  %v711 = vadd.s32 %v650, 488
  %v712 = vadd.s32 %v650, 496
  %v713 = vadd.s32 %v650, 504
  %v714 = vstv %s648
  %v715 = vadd.s32 %v714, %v650
  %v716 = vadd.s32 %v714, %v651
  %v717 = vadd.s32 %v714, %v652
  %v718 = vadd.s32 %v714, %v653
  %v719 = vadd.s32 %v714, %v654
  %v720 = vadd.s32 %v714, %v655
  %v721 = vadd.s32 %v714, %v656
  %v722 = vadd.s32 %v714, %v657
  %v723 = vadd.s32 %v714, %v658
  %v724 = vadd.s32 %v714, %v659
  %v725 = vadd.s32 %v714, %v660
  %v726 = vadd.s32 %v714, %v661
  %v727 = vadd.s32 %v714, %v662
  %v728 = vadd.s32 %v714, %v663
  %v729 = vadd.s32 %v714, %v664
  %v730 = vadd.s32 %v714, %v665
  %v731 = vadd.s32 %v714, %v666
  %v732 = vadd.s32 %v714, %v667
  %v733 = vadd.s32 %v714, %v668
  %v734 = vadd.s32 %v714, %v669
  %v735 = vadd.s32 %v714, %v670
  %v736 = vadd.s32 %v714, %v671
  %v737 = vadd.s32 %v714, %v672
  %v738 = vadd.s32 %v714, %v673
  %v739 = vadd.s32 %v714, %v674
  %v740 = vadd.s32 %v714, %v675
  %v741 = vadd.s32 %v714, %v676
  %v742 = vadd.s32 %v714, %v677
  %v743 = vadd.s32 %v714, %v678
  %v744 = vadd.s32 %v714, %v679
  %v745 = vadd.s32 %v714, %v680
  %v746 = vadd.s32 %v714, %v681
  %v747 = vadd.s32 %v714, %v682
  %v748 = vadd.s32 %v714, %v683
  %v749 = vadd.s32 %v714, %v684
  %v750 = vadd.s32 %v714, %v685
  %v751 = vadd.s32 %v714, %v686
  %v752 = vadd.s32 %v714, %v687
  %v753 = vadd.s32 %v714, %v688
  %v754 = vadd.s32 %v714, %v689
  %v755 = vadd.s32 %v714, %v690
  %v756 = vadd.s32 %v714, %v691
  %v757 = vadd.s32 %v714, %v692
  %v758 = vadd.s32 %v714, %v693
  %v759 = vadd.s32 %v714, %v694
  %v760 = vadd.s32 %v714, %v695
  %v761 = vadd.s32 %v714, %v696
  %v762 = vadd.s32 %v714, %v697
  %v763 = vadd.s32 %v714, %v698
  %v764 = vadd.s32 %v714, %v699
  %v765 = vadd.s32 %v714, %v700
  %v766 = vadd.s32 %v714, %v701
  %v767 = vadd.s32 %v714, %v702
  %v768 = vadd.s32 %v714, %v703
  %v769 = vadd.s32 %v714, %v704
  %v770 = vadd.s32 %v714, %v705
  %v771 = vadd.s32 %v714, %v706
  %v772 = vadd.s32 %v714, %v707
  %v773 = vadd.s32 %v714, %v708
  %v774 = vadd.s32 %v714, %v709
  %v775 = vadd.s32 %v714, %v710
  %v776 = vadd.s32 %v714, %v711
  %v777 = vadd.s32 %v714, %v712
  %v778 = vadd.s32 %v714, %v713
  %vm779 = vcmp.lt.s32.totalorder %v715, 512
  %vm780 = vcmp.lt.s32.totalorder %v716, 512
  %vm781 = vcmp.lt.s32.totalorder %v717, 512
  %vm782 = vcmp.lt.s32.totalorder %v718, 512
  %vm783 = vcmp.lt.s32.totalorder %v719, 512
  %vm784 = vcmp.lt.s32.totalorder %v720, 512
  %vm785 = vcmp.lt.s32.totalorder %v721, 512
  %vm786 = vcmp.lt.s32.totalorder %v722, 512
  %vm787 = vcmp.lt.s32.totalorder %v723, 512
  %vm788 = vcmp.lt.s32.totalorder %v724, 512
  %vm789 = vcmp.lt.s32.totalorder %v725, 512
  %vm790 = vcmp.lt.s32.totalorder %v726, 512
  %vm791 = vcmp.lt.s32.totalorder %v727, 512
  %vm792 = vcmp.lt.s32.totalorder %v728, 512
  %vm793 = vcmp.lt.s32.totalorder %v729, 512
  %vm794 = vcmp.lt.s32.totalorder %v730, 512
  %vm795 = vcmp.lt.s32.totalorder %v731, 512
  %vm796 = vcmp.lt.s32.totalorder %v732, 512
  %vm797 = vcmp.lt.s32.totalorder %v733, 512
  %vm798 = vcmp.lt.s32.totalorder %v734, 512
  %vm799 = vcmp.lt.s32.totalorder %v735, 512
  %vm800 = vcmp.lt.s32.totalorder %v736, 512
  %vm801 = vcmp.lt.s32.totalorder %v737, 512
  %vm802 = vcmp.lt.s32.totalorder %v738, 512
  %vm803 = vcmp.lt.s32.totalorder %v739, 512
  %vm804 = vcmp.lt.s32.totalorder %v740, 512
  %vm805 = vcmp.lt.s32.totalorder %v741, 512
  %vm806 = vcmp.lt.s32.totalorder %v742, 512
  %vm807 = vcmp.lt.s32.totalorder %v743, 512
  %vm808 = vcmp.lt.s32.totalorder %v744, 512
  %vm809 = vcmp.lt.s32.totalorder %v745, 512
  %vm810 = vcmp.lt.s32.totalorder %v746, 512
  %vm811 = vcmp.lt.s32.totalorder %v747, 512
  %vm812 = vcmp.lt.s32.totalorder %v748, 512
  %vm813 = vcmp.lt.s32.totalorder %v749, 512
  %vm814 = vcmp.lt.s32.totalorder %v750, 512
  %vm815 = vcmp.lt.s32.totalorder %v751, 512
  %vm816 = vcmp.lt.s32.totalorder %v752, 512
  %vm817 = vcmp.lt.s32.totalorder %v753, 512
  %vm818 = vcmp.lt.s32.totalorder %v754, 512
  %vm819 = vcmp.lt.s32.totalorder %v755, 512
  %vm820 = vcmp.lt.s32.totalorder %v756, 512
  %vm821 = vcmp.lt.s32.totalorder %v757, 512
  %vm822 = vcmp.lt.s32.totalorder %v758, 512
  %vm823 = vcmp.lt.s32.totalorder %v759, 512
  %vm824 = vcmp.lt.s32.totalorder %v760, 512
  %vm825 = vcmp.lt.s32.totalorder %v761, 512
  %vm826 = vcmp.lt.s32.totalorder %v762, 512
  %vm827 = vcmp.lt.s32.totalorder %v763, 512
  %vm828 = vcmp.lt.s32.totalorder %v764, 512
  %vm829 = vcmp.lt.s32.totalorder %v765, 512
  %vm830 = vcmp.lt.s32.totalorder %v766, 512
  %vm831 = vcmp.lt.s32.totalorder %v767, 512
  %vm832 = vcmp.lt.s32.totalorder %v768, 512
  %vm833 = vcmp.lt.s32.totalorder %v769, 512
  %vm834 = vcmp.lt.s32.totalorder %v770, 512
  %vm835 = vcmp.lt.s32.totalorder %v771, 512
  %vm836 = vcmp.lt.s32.totalorder %v772, 512
  %vm837 = vcmp.lt.s32.totalorder %v773, 512
  %vm838 = vcmp.lt.s32.totalorder %v774, 512
  %vm839 = vcmp.lt.s32.totalorder %v775, 512
  %vm840 = vcmp.lt.s32.totalorder %v776, 512
  %vm841 = vcmp.lt.s32.totalorder %v777, 512
  %vm842 = vcmp.lt.s32.totalorder %v778, 512
  %v843 = vsel %vm779, %v394, 0.0
  %v844 = vsel %vm780, %v397, 0.0
  %v845 = vsel %vm781, %v402, 0.0
  %v846 = vsel %vm782, %v405, 0.0
  %v847 = vsel %vm783, %v410, 0.0
  %v848 = vsel %vm784, %v413, 0.0
  %v849 = vsel %vm785, %v418, 0.0
  %v850 = vsel %vm786, %v421, 0.0
  %v851 = vsel %vm787, %v426, 0.0
  %v852 = vsel %vm788, %v429, 0.0
  %v853 = vsel %vm789, %v434, 0.0
  %v854 = vsel %vm790, %v437, 0.0
  %v855 = vsel %vm791, %v442, 0.0
  %v856 = vsel %vm792, %v445, 0.0
  %v857 = vsel %vm793, %v450, 0.0
  %v858 = vsel %vm794, %v453, 0.0
  %v859 = vsel %vm795, %v458, 0.0
  %v860 = vsel %vm796, %v461, 0.0
  %v861 = vsel %vm797, %v466, 0.0
  %v862 = vsel %vm798, %v469, 0.0
  %v863 = vsel %vm799, %v474, 0.0
  %v864 = vsel %vm800, %v477, 0.0
  %v865 = vsel %vm801, %v482, 0.0
  %v866 = vsel %vm802, %v485, 0.0
  %v867 = vsel %vm803, %v490, 0.0
  %v868 = vsel %vm804, %v493, 0.0
  %v869 = vsel %vm805, %v498, 0.0
  %v870 = vsel %vm806, %v501, 0.0
  %v871 = vsel %vm807, %v506, 0.0
  %v872 = vsel %vm808, %v509, 0.0
  %v873 = vsel %vm809, %v514, 0.0
  %v874 = vsel %vm810, %v517, 0.0
  %v875 = vsel %vm811, %v522, 0.0
  %v876 = vsel %vm812, %v525, 0.0
  %v877 = vsel %vm813, %v530, 0.0
  %v878 = vsel %vm814, %v533, 0.0
  %v879 = vsel %vm815, %v538, 0.0
  %v880 = vsel %vm816, %v541, 0.0
  %v881 = vsel %vm817, %v546, 0.0
  %v882 = vsel %vm818, %v549, 0.0
  %v883 = vsel %vm819, %v554, 0.0
  %v884 = vsel %vm820, %v557, 0.0
  %v885 = vsel %vm821, %v562, 0.0
  %v886 = vsel %vm822, %v565, 0.0
  %v887 = vsel %vm823, %v570, 0.0
  %v888 = vsel %vm824, %v573, 0.0
  %v889 = vsel %vm825, %v578, 0.0
  %v890 = vsel %vm826, %v581, 0.0
  %v891 = vsel %vm827, %v586, 0.0
  %v892 = vsel %vm828, %v589, 0.0
  %v893 = vsel %vm829, %v594, 0.0
  %v894 = vsel %vm830, %v597, 0.0
  %v895 = vsel %vm831, %v602, 0.0
  %v896 = vsel %vm832, %v605, 0.0
  %v897 = vsel %vm833, %v610, 0.0
  %v898 = vsel %vm834, %v613, 0.0
  %v899 = vsel %vm835, %v618, 0.0
  %v900 = vsel %vm836, %v621, 0.0
  %v901 = vsel %vm837, %v626, 0.0
  %v902 = vsel %vm838, %v629, 0.0
  %v903 = vsel %vm839, %v634, 0.0
  %v904 = vsel %vm840, %v637, 0.0
  %v905 = vsel %vm841, %v642, 0.0
  %v906 = vsel %vm842, %v645, 0.0
  %v907 = vadd.f32 %v843, %v844
  %v908 = vadd.f32 %v907, %v845
  %v909 = vadd.f32 %v908, %v846
  %v910 = vadd.f32 %v909, %v847
  %v911 = vadd.f32 %v910, %v848
  %v912 = vadd.f32 %v911, %v849
  %v913 = vadd.f32 %v912, %v850
  %v914 = vadd.f32 %v913, %v851
  %v915 = vadd.f32 %v914, %v852
  %v916 = vadd.f32 %v915, %v853
  %v917 = vadd.f32 %v916, %v854
  %v918 = vadd.f32 %v917, %v855
  %v919 = vadd.f32 %v918, %v856
  %v920 = vadd.f32 %v919, %v857
  %v921 = vadd.f32 %v920, %v858
  %v922 = vadd.f32 %v921, %v859
  %v923 = vadd.f32 %v922, %v860
  %v924 = vadd.f32 %v923, %v861
  %v925 = vadd.f32 %v924, %v862
  %v926 = vadd.f32 %v925, %v863
  %v927 = vadd.f32 %v926, %v864
  %v928 = vadd.f32 %v927, %v865
  %v929 = vadd.f32 %v928, %v866
  %v930 = vadd.f32 %v929, %v867
  %v931 = vadd.f32 %v930, %v868
  %v932 = vadd.f32 %v931, %v869
  %v933 = vadd.f32 %v932, %v870
  %v934 = vadd.f32 %v933, %v871
  %v935 = vadd.f32 %v934, %v872
  %v936 = vadd.f32 %v935, %v873
  %v937 = vadd.f32 %v936, %v874
  %v938 = vadd.f32 %v937, %v875
  %v939 = vadd.f32 %v938, %v876
  %v940 = vadd.f32 %v939, %v877
  %v941 = vadd.f32 %v940, %v878
  %v942 = vadd.f32 %v941, %v879
  %v943 = vadd.f32 %v942, %v880
  %v944 = vadd.f32 %v943, %v881
  %v945 = vadd.f32 %v944, %v882
  %v946 = vadd.f32 %v945, %v883
  %v947 = vadd.f32 %v946, %v884
  %v948 = vadd.f32 %v947, %v885
  %v949 = vadd.f32 %v948, %v886
  %v950 = vadd.f32 %v949, %v887
  %v951 = vadd.f32 %v950, %v888
  %v952 = vadd.f32 %v951, %v889
  %v953 = vadd.f32 %v952, %v890
  %v954 = vadd.f32 %v953, %v891
  %v955 = vadd.f32 %v954, %v892
  %v956 = vadd.f32 %v955, %v893
  %v957 = vadd.f32 %v956, %v894
  %v958 = vadd.f32 %v957, %v895
  %v959 = vadd.f32 %v958, %v896
  %v960 = vadd.f32 %v959, %v897
  %v961 = vadd.f32 %v960, %v898
  %v962 = vadd.f32 %v961, %v899
  %v963 = vadd.f32 %v962, %v900
  %v964 = vadd.f32 %v963, %v901
  %v965 = vadd.f32 %v964, %v902
  %v966 = vadd.f32 %v965, %v903
  %v967 = vadd.f32 %v966, %v904
  %v968 = vadd.f32 %v967, %v905
  %v969 = vadd.f32 %v968, %v906
  %970 = vst [vmem:[%s2] sm:$0xff] %v969
  %v971 = vmul.f32 %v843, %v843
  %v972 = vmul.f32 %v844, %v844
  %v973 = vmul.f32 %v845, %v845
  %v974 = vmul.f32 %v846, %v846
  %v975 = vmul.f32 %v847, %v847
  %v976 = vmul.f32 %v848, %v848
  %v977 = vmul.f32 %v849, %v849
  %v978 = vmul.f32 %v850, %v850
  %v979 = vmul.f32 %v851, %v851
  %v980 = vmul.f32 %v852, %v852
  %v981 = vmul.f32 %v853, %v853
  %v982 = vmul.f32 %v854, %v854
  %v983 = vmul.f32 %v855, %v855
  %v984 = vmul.f32 %v856, %v856
  %v985 = vmul.f32 %v857, %v857
  %v986 = vmul.f32 %v858, %v858
  %v987 = vmul.f32 %v859, %v859
  %v988 = vmul.f32 %v860, %v860
  %v989 = vmul.f32 %v861, %v861
  %v990 = vmul.f32 %v862, %v862
  %v991 = vmul.f32 %v863, %v863
  %v992 = vmul.f32 %v864, %v864
  %v993 = vmul.f32 %v865, %v865
  %v994 = vmul.f32 %v866, %v866
  %v995 = vmul.f32 %v867, %v867
  %v996 = vmul.f32 %v868, %v868
  %v997 = vmul.f32 %v869, %v869
  %v998 = vmul.f32 %v870, %v870
  %v999 = vmul.f32 %v871, %v871
  %v1000 = vmul.f32 %v872, %v872
  %v1001 = vmul.f32 %v873, %v873
  %v1002 = vmul.f32 %v874, %v874
  %v1003 = vmul.f32 %v875, %v875
  %v1004 = vmul.f32 %v876, %v876
  %v1005 = vmul.f32 %v877, %v877
  %v1006 = vmul.f32 %v878, %v878
  %v1007 = vmul.f32 %v879, %v879
  %v1008 = vmul.f32 %v880, %v880
  %v1009 = vmul.f32 %v881, %v881
  %v1010 = vmul.f32 %v882, %v882
  %v1011 = vmul.f32 %v883, %v883
  %v1012 = vmul.f32 %v884, %v884
  %v1013 = vmul.f32 %v885, %v885
  %v1014 = vmul.f32 %v886, %v886
  %v1015 = vmul.f32 %v887, %v887
  %v1016 = vmul.f32 %v888, %v888
  %v1017 = vmul.f32 %v889, %v889
  %v1018 = vmul.f32 %v890, %v890
  %v1019 = vmul.f32 %v891, %v891
  %v1020 = vmul.f32 %v892, %v892
  %v1021 = vmul.f32 %v893, %v893
  %v1022 = vmul.f32 %v894, %v894
  %v1023 = vmul.f32 %v895, %v895
  %v1024 = vmul.f32 %v896, %v896
  %v1025 = vmul.f32 %v897, %v897
  %v1026 = vmul.f32 %v898, %v898
  %v1027 = vmul.f32 %v899, %v899
  %v1028 = vmul.f32 %v900, %v900
  %v1029 = vmul.f32 %v901, %v901
  %v1030 = vmul.f32 %v902, %v902
  %v1031 = vmul.f32 %v903, %v903
  %v1032 = vmul.f32 %v904, %v904
  %v1033 = vmul.f32 %v905, %v905
  %v1034 = vmul.f32 %v906, %v906
  %v1035 = vadd.f32 %v971, %v972
  %v1036 = vadd.f32 %v1035, %v973
  %v1037 = vadd.f32 %v1036, %v974
  %v1038 = vadd.f32 %v1037, %v975
  %v1039 = vadd.f32 %v1038, %v976
  %v1040 = vadd.f32 %v1039, %v977
  %v1041 = vadd.f32 %v1040, %v978
  %v1042 = vadd.f32 %v1041, %v979
  %v1043 = vadd.f32 %v1042, %v980
  %v1044 = vadd.f32 %v1043, %v981
  %v1045 = vadd.f32 %v1044, %v982
  %v1046 = vadd.f32 %v1045, %v983
  %v1047 = vadd.f32 %v1046, %v984
  %v1048 = vadd.f32 %v1047, %v985
  %v1049 = vadd.f32 %v1048, %v986
  %v1050 = vadd.f32 %v1049, %v987
  %v1051 = vadd.f32 %v1050, %v988
  %v1052 = vadd.f32 %v1051, %v989
  %v1053 = vadd.f32 %v1052, %v990
  %v1054 = vadd.f32 %v1053, %v991
  %v1055 = vadd.f32 %v1054, %v992
  %v1056 = vadd.f32 %v1055, %v993
  %v1057 = vadd.f32 %v1056, %v994
  %v1058 = vadd.f32 %v1057, %v995
  %v1059 = vadd.f32 %v1058, %v996
  %v1060 = vadd.f32 %v1059, %v997
  %v1061 = vadd.f32 %v1060, %v998
  %v1062 = vadd.f32 %v1061, %v999
  %v1063 = vadd.f32 %v1062, %v1000
  %v1064 = vadd.f32 %v1063, %v1001
  %v1065 = vadd.f32 %v1064, %v1002
  %v1066 = vadd.f32 %v1065, %v1003
  %v1067 = vadd.f32 %v1066, %v1004
  %v1068 = vadd.f32 %v1067, %v1005
  %v1069 = vadd.f32 %v1068, %v1006
  %v1070 = vadd.f32 %v1069, %v1007
  %v1071 = vadd.f32 %v1070, %v1008
  %v1072 = vadd.f32 %v1071, %v1009
  %v1073 = vadd.f32 %v1072, %v1010
  %v1074 = vadd.f32 %v1073, %v1011
  %v1075 = vadd.f32 %v1074, %v1012
  %v1076 = vadd.f32 %v1075, %v1013
  %v1077 = vadd.f32 %v1076, %v1014
  %v1078 = vadd.f32 %v1077, %v1015
  %v1079 = vadd.f32 %v1078, %v1016
  %v1080 = vadd.f32 %v1079, %v1017
  %v1081 = vadd.f32 %v1080, %v1018
  %v1082 = vadd.f32 %v1081, %v1019
  %v1083 = vadd.f32 %v1082, %v1020
  %v1084 = vadd.f32 %v1083, %v1021
  %v1085 = vadd.f32 %v1084, %v1022
  %v1086 = vadd.f32 %v1085, %v1023
  %v1087 = vadd.f32 %v1086, %v1024
  %v1088 = vadd.f32 %v1087, %v1025
  %v1089 = vadd.f32 %v1088, %v1026
  %v1090 = vadd.f32 %v1089, %v1027
  %v1091 = vadd.f32 %v1090, %v1028
  %v1092 = vadd.f32 %v1091, %v1029
  %v1093 = vadd.f32 %v1092, %v1030
  %v1094 = vadd.f32 %v1093, %v1031
  %v1095 = vadd.f32 %v1094, %v1032
  %v1096 = vadd.f32 %v1095, %v1033
  %v1097 = vadd.f32 %v1096, %v1034
  %1098 = vst [vmem:[%s3] sm:$0xff] %v1097
  // Predicated region
  $region10: #{cnn_block_forward.2} parent=0 // pred_check
    _
  $region11: #{cnn_block_forward.2} parent=0 // pred_check_branch
    %1100 = sbr.rel (0) target = $region13
  $region12: #{cnn_block_forward.2} parent=0 // pred_region
    _
  $region13: #{cnn_block_forward.2} parent=0 // pred_fallthru
    _
  // Predicated region
  $region14: #{cnn_block_forward.2} parent=0 // pred_check
    _
  $region15: #{cnn_block_forward.2} parent=0 // pred_check_branch
    %1102 = sbr.rel (0) target = $region17
  $region16: #{cnn_block_forward.2} parent=0 // pred_region
    _
  $region17: #{cnn_block_forward.2} parent=0 // pred_fallthru
    _
  // Predicated region
  $region18: #{cnn_block_forward.2} parent=0 // pred_check
    _
  $region19: #{cnn_block_forward.2} parent=0 // pred_check_branch
    %1104 = sbr.rel (0) target = $region21
  $region20: #{cnn_block_forward.2} parent=0 // pred_region
    _
  $region21: #{cnn_block_forward.2} parent=0 // pred_fallthru
    _
  // Predicated region
  $region22: #{cnn_block_forward.2} parent=0 // pred_check
    _
  $region23: #{cnn_block_forward.2} parent=0 // pred_check_branch
    %1106 = sbr.rel (0) target = $region25
  $region24: #{cnn_block_forward.2} parent=0 // pred_region
    _
  $region25: #{cnn_block_forward.2} parent=0 // pred_fallthru
    _

// kernel: cnn_block_forward.3
$region0: #{cnn_block_forward.3}
  #allocation0 [shape = 'u32[]', space=smem, size = 0x4, offset = 0x4, fixed_abs, tag = 'smem constant byte address 0x4 - core index']
  #allocation1 [shape = 'u32[144,128]{1,0:T(1,128)}', space=vmem, size = 0x12000, scoped, tag = 'internal scratch']
  %s0 = inlined_call_operand.vmem [shape: bf16[512,36], index: 0, kind: input, shape index: {}]
  %s1 = inlined_call_operand.vmem [shape: bf16[36,128], index: 1, kind: input, shape index: {}]
  %s2 = inlined_call_operand.vmem [shape: f32[1,128], index: 2, kind: input, shape index: {}]
  %s3 = inlined_call_operand.vmem [shape: f32[1,128], index: 3, kind: input, shape index: {}]
  %s4 = inlined_call_operand.vmem [shape: f32[512,128], index: 4, kind: output, shape index: {}]
  %s5 = sld [smem:[#allocation0]]
  $region26: #{cnn_block_forward.3} parent=0
    _
  %s7 = ssub.s32 1, %s5
  %s8 = scalar_select 0, %s7, %s5
  // Predicated region
  $region2: #{cnn_block_forward.3} parent=0 // pred_check
    _
  $region3: #{cnn_block_forward.3} parent=0 // pred_check_branch
    %10 = sbr.rel (0) target = $region5
  $region4: #{cnn_block_forward.3} parent=0 // pred_region
    _
  $region5: #{cnn_block_forward.3} parent=0 // pred_fallthru
    _
  // Predicated region
  $region6: #{cnn_block_forward.3} parent=0 // pred_check
    _
  $region7: #{cnn_block_forward.3} parent=0 // pred_check_branch
    %12 = sbr.rel (0) target = $region9
  $region8: #{cnn_block_forward.3} parent=0 // pred_region
    _
  $region9: #{cnn_block_forward.3} parent=0 // pred_fallthru
    _
  // Predicated region
  $region10: #{cnn_block_forward.3} parent=0 // pred_check
    _
  $region11: #{cnn_block_forward.3} parent=0 // pred_check_branch
    %14 = sbr.rel (0) target = $region13
  $region12: #{cnn_block_forward.3} parent=0 // pred_region
    _
  $region13: #{cnn_block_forward.3} parent=0 // pred_fallthru
    _
  // Predicated region
  $region14: #{cnn_block_forward.3} parent=0 // pred_check
    _
  $region15: #{cnn_block_forward.3} parent=0 // pred_check_branch
    %16 = sbr.rel (0) target = $region17
  $region16: #{cnn_block_forward.3} parent=0 // pred_region
    _
  $region17: #{cnn_block_forward.3} parent=0 // pred_fallthru
    _
  %v18 = vld [vmem:[%s0] sm:$0xf]
  %v19 = vld [vmem:[%s0 + $0x4] sm:$0xf]
  %v20 = vld [vmem:[%s0 + $0x8] sm:$0xf]
  %v21 = vld [vmem:[%s0 + $0xc] sm:$0xf]
  %v22 = vld [vmem:[%s0 + $0x10] sm:$0xf]
  %v23 = vld [vmem:[%s0 + $0x14] sm:$0xf]
  %v24 = vld [vmem:[%s0 + $0x18] sm:$0xf]
  %v25 = vld [vmem:[%s0 + $0x1c] sm:$0xf]
  %v26 = vld [vmem:[%s0 + $0x20] sm:$0xf]
  %v27 = vld [vmem:[%s0 + $0x24] sm:$0xf]
  %v28 = vld [vmem:[%s0 + $0x28] sm:$0xf]
  %v29 = vld [vmem:[%s0 + $0x2c] sm:$0xf]
  %v30 = vld [vmem:[%s0 + $0x30] sm:$0xf]
  %v31 = vld [vmem:[%s0 + $0x34] sm:$0xf]
  %v32 = vld [vmem:[%s0 + $0x38] sm:$0xf]
  %v33 = vld [vmem:[%s0 + $0x3c] sm:$0xf]
  %v34 = vld [vmem:[%s0 + $0x40] sm:$0xf]
  %v35 = vld [vmem:[%s0 + $0x44] sm:$0xf]
  %v36 = vld [vmem:[%s0 + $0x48] sm:$0xf]
  %v37 = vld [vmem:[%s0 + $0x4c] sm:$0xf]
  %v38 = vld [vmem:[%s0 + $0x50] sm:$0xf]
  %v39 = vld [vmem:[%s0 + $0x54] sm:$0xf]
  %v40 = vld [vmem:[%s0 + $0x58] sm:$0xf]
  %v41 = vld [vmem:[%s0 + $0x5c] sm:$0xf]
  %v42 = vld [vmem:[%s0 + $0x60] sm:$0xf]
  %v43 = vld [vmem:[%s0 + $0x64] sm:$0xf]
  %v44 = vld [vmem:[%s0 + $0x68] sm:$0xf]
  %v45 = vld [vmem:[%s0 + $0x6c] sm:$0xf]
  %v46 = vld [vmem:[%s0 + $0x70] sm:$0xf]
  %v47 = vld [vmem:[%s0 + $0x74] sm:$0xf]
  %v48 = vld [vmem:[%s0 + $0x78] sm:$0xf]
  %v49 = vld [vmem:[%s0 + $0x7c] sm:$0xf]
  %v50 = vld [vmem:[%s0 + $0x80] sm:$0xf]
  %v51 = vld [vmem:[%s0 + $0x84] sm:$0xf]
  %v52 = vld [vmem:[%s0 + $0x88] sm:$0xf]
  %v53 = vld [vmem:[%s0 + $0x8c] sm:$0xf]
  %v54 = vld [vmem:[%s0 + $0x90] sm:$0xf]
  %v55 = vld [vmem:[%s0 + $0x94] sm:$0xf]
  %v56 = vld [vmem:[%s0 + $0x98] sm:$0xf]
  %v57 = vld [vmem:[%s0 + $0x9c] sm:$0xf]
  %v58 = vld [vmem:[%s0 + $0xa0] sm:$0xf]
  %v59 = vld [vmem:[%s0 + $0xa4] sm:$0xf]
  %v60 = vld [vmem:[%s0 + $0xa8] sm:$0xf]
  %v61 = vld [vmem:[%s0 + $0xac] sm:$0xf]
  %v62 = vld [vmem:[%s0 + $0xb0] sm:$0xf]
  %v63 = vld [vmem:[%s0 + $0xb4] sm:$0xf]
  %v64 = vld [vmem:[%s0 + $0xb8] sm:$0xf]
  %v65 = vld [vmem:[%s0 + $0xbc] sm:$0xf]
  %v66 = vld [vmem:[%s0 + $0xc0] sm:$0xf]
  %v67 = vld [vmem:[%s0 + $0xc4] sm:$0xf]
  %v68 = vld [vmem:[%s0 + $0xc8] sm:$0xf]
  %v69 = vld [vmem:[%s0 + $0xcc] sm:$0xf]
  %v70 = vld [vmem:[%s0 + $0xd0] sm:$0xf]
  %v71 = vld [vmem:[%s0 + $0xd4] sm:$0xf]
  %v72 = vld [vmem:[%s0 + $0xd8] sm:$0xf]
  %v73 = vld [vmem:[%s0 + $0xdc] sm:$0xf]
  %v74 = vld [vmem:[%s0 + $0xe0] sm:$0xf]
  %v75 = vld [vmem:[%s0 + $0xe4] sm:$0xf]
  %v76 = vld [vmem:[%s0 + $0xe8] sm:$0xf]
  %v77 = vld [vmem:[%s0 + $0xec] sm:$0xf]
  %v78 = vld [vmem:[%s0 + $0xf0] sm:$0xf]
  %v79 = vld [vmem:[%s0 + $0xf4] sm:$0xf]
  %v80 = vld [vmem:[%s0 + $0xf8] sm:$0xf]
  %v81 = vld [vmem:[%s0 + $0xfc] sm:$0xf]
  %v82 = vld [vmem:[%s1] sm:$0xf]
  %v83 = vld [vmem:[%s1 + $0x4] sm:$0xf]
  %v84 = vld [vmem:[%s1 + $0x8] sm:$0xf]
  %v85 = vld [vmem:[%s1 + $0xc] sm:$0xf]
  %v86 = vld [vmem:[%s1 + $0x10] sm:$0x3]
  %v151 = vunpack.c.l.b16 %v18
  %v152 = vunpack.c.l.b16 %v19
  %v153 = vunpack.c.l.b16 %v20
  %v154 = vunpack.c.l.b16 %v21
  %v155 = vunpack.c.l.b16 %v22
  %v156 = vunpack.c.l.b16 %v23
  %v157 = vunpack.c.l.b16 %v24
  %v158 = vunpack.c.l.b16 %v25
  %v159 = vunpack.c.l.b16 %v26
  %v160 = vunpack.c.l.b16 %v27
  %v161 = vunpack.c.l.b16 %v28
  %v162 = vunpack.c.l.b16 %v29
  %v163 = vunpack.c.l.b16 %v30
  %v164 = vunpack.c.l.b16 %v31
  %v165 = vunpack.c.l.b16 %v32
  %v166 = vunpack.c.l.b16 %v33
  %v167 = vunpack.c.l.b16 %v34
  %v168 = vunpack.c.l.b16 %v35
  %v169 = vunpack.c.l.b16 %v36
  %v170 = vunpack.c.l.b16 %v37
  %v171 = vunpack.c.l.b16 %v38
  %v172 = vunpack.c.l.b16 %v39
  %v173 = vunpack.c.l.b16 %v40
  %v174 = vunpack.c.l.b16 %v41
  %v175 = vunpack.c.l.b16 %v42
  %v176 = vunpack.c.l.b16 %v43
  %v177 = vunpack.c.l.b16 %v44
  %v178 = vunpack.c.l.b16 %v45
  %v179 = vunpack.c.l.b16 %v46
  %v180 = vunpack.c.l.b16 %v47
  %v181 = vunpack.c.l.b16 %v48
  %v182 = vunpack.c.l.b16 %v49
  %v183 = vunpack.c.l.b16 %v50
  %v184 = vunpack.c.l.b16 %v51
  %v185 = vunpack.c.l.b16 %v52
  %v186 = vunpack.c.l.b16 %v53
  %v187 = vunpack.c.l.b16 %v54
  %v188 = vunpack.c.l.b16 %v55
  %v189 = vunpack.c.l.b16 %v56
  %v190 = vunpack.c.l.b16 %v57
  %v191 = vunpack.c.l.b16 %v58
  %v192 = vunpack.c.l.b16 %v59
  %v193 = vunpack.c.l.b16 %v60
  %v194 = vunpack.c.l.b16 %v61
  %v195 = vunpack.c.l.b16 %v62
  %v196 = vunpack.c.l.b16 %v63
  %v197 = vunpack.c.l.b16 %v64
  %v198 = vunpack.c.l.b16 %v65
  %v199 = vunpack.c.l.b16 %v66
  %v200 = vunpack.c.l.b16 %v67
  %v201 = vunpack.c.l.b16 %v68
  %v202 = vunpack.c.l.b16 %v69
  %v203 = vunpack.c.l.b16 %v70
  %v204 = vunpack.c.l.b16 %v71
  %v205 = vunpack.c.l.b16 %v72
  %v206 = vunpack.c.l.b16 %v73
  %v207 = vunpack.c.l.b16 %v74
  %v208 = vunpack.c.l.b16 %v75
  %v209 = vunpack.c.l.b16 %v76
  %v210 = vunpack.c.l.b16 %v77
  %v211 = vunpack.c.l.b16 %v78
  %v212 = vunpack.c.l.b16 %v79
  %v213 = vunpack.c.l.b16 %v80
  %v214 = vunpack.c.l.b16 %v81
  %v215 = vpack.c.b16 %v152, %v151
  %v216 = vpack.c.b16 %v154, %v153
  %v217 = vpack.c.b16 %v156, %v155
  %v218 = vpack.c.b16 %v158, %v157
  %v219 = vpack.c.b16 %v160, %v159
  %v220 = vpack.c.b16 %v162, %v161
  %v221 = vpack.c.b16 %v164, %v163
  %v222 = vpack.c.b16 %v166, %v165
  %v223 = vpack.c.b16 %v168, %v167
  %v224 = vpack.c.b16 %v170, %v169
  %v225 = vpack.c.b16 %v172, %v171
  %v226 = vpack.c.b16 %v174, %v173
  %v227 = vpack.c.b16 %v176, %v175
  %v228 = vpack.c.b16 %v178, %v177
  %v229 = vpack.c.b16 %v180, %v179
  %v230 = vpack.c.b16 %v182, %v181
  %v231 = vpack.c.b16 %v184, %v183
  %v232 = vpack.c.b16 %v186, %v185
  %v233 = vpack.c.b16 %v188, %v187
  %v234 = vpack.c.b16 %v190, %v189
  %v235 = vpack.c.b16 %v192, %v191
  %v236 = vpack.c.b16 %v194, %v193
  %v237 = vpack.c.b16 %v196, %v195
  %v238 = vpack.c.b16 %v198, %v197
  %v239 = vpack.c.b16 %v200, %v199
  %v240 = vpack.c.b16 %v202, %v201
  %v241 = vpack.c.b16 %v204, %v203
  %v242 = vpack.c.b16 %v206, %v205
  %v243 = vpack.c.b16 %v208, %v207
  %v244 = vpack.c.b16 %v210, %v209
  %v245 = vpack.c.b16 %v212, %v211
  %v246 = vpack.c.b16 %v214, %v213
  %v252 = vunpack.c.l.b16 %v82
  %v253 = vunpack.c.l.b16 %v83
  %v254 = vunpack.c.l.b16 %v84
  %v255 = vunpack.c.l.b16 %v85
  %v256 = vunpack.c.l.b16 %v86
  %v257 = vpack.c.b16 %v253, %v252
  %v258 = vpack.c.b16 %v255, %v254
  %v259 = vpack.c.b16 %v256, %v256
  %vm262 = vcmask 293888
  %v264 = vsel %vm262, %v215, 0
  %v267 = vsel %vm262, %v216, 0
  %v270 = vsel %vm262, %v217, 0
  %v273 = vsel %vm262, %v218, 0
  %v276 = vsel %vm262, %v219, 0
  %v279 = vsel %vm262, %v220, 0
  %v282 = vsel %vm262, %v221, 0
  %v285 = vsel %vm262, %v222, 0
  %v288 = vsel %vm262, %v223, 0
  %v291 = vsel %vm262, %v224, 0
  %v294 = vsel %vm262, %v225, 0
  %v297 = vsel %vm262, %v226, 0
  %v300 = vsel %vm262, %v227, 0
  %v303 = vsel %vm262, %v228, 0
  %v306 = vsel %vm262, %v229, 0
  %v309 = vsel %vm262, %v230, 0
  %v312 = vsel %vm262, %v231, 0
  %v315 = vsel %vm262, %v232, 0
  %v318 = vsel %vm262, %v233, 0
  %v321 = vsel %vm262, %v234, 0
  %v324 = vsel %vm262, %v235, 0
  %v327 = vsel %vm262, %v236, 0
  %v330 = vsel %vm262, %v237, 0
  %v333 = vsel %vm262, %v238, 0
  %v336 = vsel %vm262, %v239, 0
  %v339 = vsel %vm262, %v240, 0
  %v342 = vsel %vm262, %v241, 0
  %v345 = vsel %vm262, %v242, 0
  %v348 = vsel %vm262, %v243, 0
  %v351 = vsel %vm262, %v244, 0
  %v354 = vsel %vm262, %v245, 0
  %v357 = vsel %vm262, %v246, 0
  %vm359 = vcmask 1041408
  %v361 = vsel %vm359, %v259, 0
  %363 = vmatprep.subr.bf16.mxu0 0
  %364 = vmatpush1.bf16.msra.mxu0 %v257
  %365 = vmatprep.subr.bf16.mxu0 0
  %366 = vmatpush1.bf16.msra.mxu0 %v258
  %367 = vmatprep.subr.bf16.mxu0 0
  %368 = vmatpush1.bf16.msra.mxu0 %v361
  %369 = vmatprep.subr.bf16.mxu0 0
  %370 = vmatpush1.bf16.msra.mxu0 0
  %371 = vmatprep.subr.bf16.mxu0 0
  %372 = vmatpush1.bf16.msra.mxu0 0
  %373 = vmatprep.subr.bf16.mxu0 0
  %374 = vmatpush1.bf16.msra.mxu0 0
  %375 = vmatprep.subr.bf16.mxu0 0
  %376 = vmatpush1.bf16.msra.mxu0 0
  %377 = vmatprep.subr.bf16.mxu0 0
  %378 = vmatpush1.bf16.msra.mxu0 0
  %379 = vmatprep.subr.bf16.mxu0 0
  %380 = vmatpush1.bf16.msra.mxu0 0
  %381 = vmatprep.subr.bf16.mxu0 0
  %382 = vmatpush1.bf16.msra.mxu0 0
  %383 = vmatprep.subr.bf16.mxu0 0
  %384 = vmatpush1.bf16.msra.mxu0 0
  %385 = vmatprep.subr.bf16.mxu0 0
  %386 = vmatpush1.bf16.msra.mxu0 0
  %387 = vmatprep.subr.bf16.mxu0 0
  %388 = vmatpush1.bf16.msra.mxu0 0
  %389 = vmatprep.subr.bf16.mxu0 0
  %390 = vmatpush1.bf16.msra.mxu0 0
  %391 = vmatprep.subr.bf16.mxu0 0
  %392 = vmatpush1.bf16.msra.mxu0 0
  %393 = vmatprep.subr.bf16.mxu0 0
  %394 = vmatpush1.bf16.msra.mxu0 0
  %395 = vmatprep.mubr.bf16.mxu0 0
  %396 = vmatmul.mubr.bf16.gmra.mrb[0].mxu0 %v264
  %v397 = vpop.f32.mrb[0].mxu0
  %v398 = vadd.f32 0.0, %v397
  %v399 = vpop.f32.mrb[0].mxu0
  %v400 = vpop.f32.mrb[0].mxu0
  %v401 = vadd.f32 0.0, %v400
  %v402 = vpop.f32.mrb[0].mxu0
  %403 = vmatprep.mubr.bf16.mxu0 0
  %404 = vmatmul.mubr.bf16.gmra.mrb[0].mxu0 %v267
  %v405 = vpop.f32.mrb[0].mxu0
  %v406 = vadd.f32 0.0, %v405
  %v407 = vpop.f32.mrb[0].mxu0
  %v408 = vpop.f32.mrb[0].mxu0
  %v409 = vadd.f32 0.0, %v408
  %v410 = vpop.f32.mrb[0].mxu0
  %411 = vmatprep.mubr.bf16.mxu0 0
  %412 = vmatmul.mubr.bf16.gmra.mrb[0].mxu0 %v270
  %v413 = vpop.f32.mrb[0].mxu0
  %v414 = vadd.f32 0.0, %v413
  %v415 = vpop.f32.mrb[0].mxu0
  %v416 = vpop.f32.mrb[0].mxu0
  %v417 = vadd.f32 0.0, %v416
  %v418 = vpop.f32.mrb[0].mxu0
  %419 = vmatprep.mubr.bf16.mxu0 0
  %420 = vmatmul.mubr.bf16.gmra.mrb[0].mxu0 %v273
  %v421 = vpop.f32.mrb[0].mxu0
  %v422 = vadd.f32 0.0, %v421
  %v423 = vpop.f32.mrb[0].mxu0
  %v424 = vpop.f32.mrb[0].mxu0
  %v425 = vadd.f32 0.0, %v424
  %v426 = vpop.f32.mrb[0].mxu0
  %427 = vmatprep.mubr.bf16.mxu0 0
  %428 = vmatmul.mubr.bf16.gmra.mrb[0].mxu0 %v276
  %v429 = vpop.f32.mrb[0].mxu0
  %v430 = vadd.f32 0.0, %v429
  %v431 = vpop.f32.mrb[0].mxu0
  %v432 = vpop.f32.mrb[0].mxu0
  %v433 = vadd.f32 0.0, %v432
  %v434 = vpop.f32.mrb[0].mxu0
  %435 = vmatprep.mubr.bf16.mxu0 0
  %436 = vmatmul.mubr.bf16.gmra.mrb[0].mxu0 %v279
  %v437 = vpop.f32.mrb[0].mxu0
  %v438 = vadd.f32 0.0, %v437
  %v439 = vpop.f32.mrb[0].mxu0
  %v440 = vpop.f32.mrb[0].mxu0
  %v441 = vadd.f32 0.0, %v440
  %v442 = vpop.f32.mrb[0].mxu0
  %443 = vmatprep.mubr.bf16.mxu0 0
  %444 = vmatmul.mubr.bf16.gmra.mrb[0].mxu0 %v282
  %v445 = vpop.f32.mrb[0].mxu0
  %v446 = vadd.f32 0.0, %v445
  %v447 = vpop.f32.mrb[0].mxu0
  %v448 = vpop.f32.mrb[0].mxu0
  %v449 = vadd.f32 0.0, %v448
  %v450 = vpop.f32.mrb[0].mxu0
  %451 = vmatprep.mubr.bf16.mxu0 0
  %452 = vmatmul.mubr.bf16.gmra.mrb[0].mxu0 %v285
  %v453 = vpop.f32.mrb[0].mxu0
  %v454 = vadd.f32 0.0, %v453
  %v455 = vpop.f32.mrb[0].mxu0
  %v456 = vpop.f32.mrb[0].mxu0
  %v457 = vadd.f32 0.0, %v456
  %v458 = vpop.f32.mrb[0].mxu0
  %459 = vmatprep.mubr.bf16.mxu0 0
  %460 = vmatmul.mubr.bf16.gmra.mrb[0].mxu0 %v288
  %v461 = vpop.f32.mrb[0].mxu0
  %v462 = vadd.f32 0.0, %v461
  %v463 = vpop.f32.mrb[0].mxu0
  %v464 = vpop.f32.mrb[0].mxu0
  %v465 = vadd.f32 0.0, %v464
  %v466 = vpop.f32.mrb[0].mxu0
  %467 = vmatprep.mubr.bf16.mxu0 0
  %468 = vmatmul.mubr.bf16.gmra.mrb[0].mxu0 %v291
  %v469 = vpop.f32.mrb[0].mxu0
  %v470 = vadd.f32 0.0, %v469
  %v471 = vpop.f32.mrb[0].mxu0
  %v472 = vpop.f32.mrb[0].mxu0
  %v473 = vadd.f32 0.0, %v472
  %v474 = vpop.f32.mrb[0].mxu0
  %475 = vmatprep.mubr.bf16.mxu0 0
  %476 = vmatmul.mubr.bf16.gmra.mrb[0].mxu0 %v294
  %v477 = vpop.f32.mrb[0].mxu0
  %v478 = vadd.f32 0.0, %v477
  %v479 = vpop.f32.mrb[0].mxu0
  %v480 = vpop.f32.mrb[0].mxu0
  %v481 = vadd.f32 0.0, %v480
  %v482 = vpop.f32.mrb[0].mxu0
  %483 = vmatprep.mubr.bf16.mxu0 0
  %484 = vmatmul.mubr.bf16.gmra.mrb[0].mxu0 %v297
  %v485 = vpop.f32.mrb[0].mxu0
  %v486 = vadd.f32 0.0, %v485
  %v487 = vpop.f32.mrb[0].mxu0
  %v488 = vpop.f32.mrb[0].mxu0
  %v489 = vadd.f32 0.0, %v488
  %v490 = vpop.f32.mrb[0].mxu0
  %491 = vmatprep.mubr.bf16.mxu0 0
  %492 = vmatmul.mubr.bf16.gmra.mrb[0].mxu0 %v300
  %v493 = vpop.f32.mrb[0].mxu0
  %v494 = vadd.f32 0.0, %v493
  %v495 = vpop.f32.mrb[0].mxu0
  %v496 = vpop.f32.mrb[0].mxu0
  %v497 = vadd.f32 0.0, %v496
  %v498 = vpop.f32.mrb[0].mxu0
  %499 = vmatprep.mubr.bf16.mxu0 0
  %500 = vmatmul.mubr.bf16.gmra.mrb[0].mxu0 %v303
  %v501 = vpop.f32.mrb[0].mxu0
  %v502 = vadd.f32 0.0, %v501
  %v503 = vpop.f32.mrb[0].mxu0
  %v504 = vpop.f32.mrb[0].mxu0
  %v505 = vadd.f32 0.0, %v504
  %v506 = vpop.f32.mrb[0].mxu0
  %507 = vmatprep.mubr.bf16.mxu0 0
  %508 = vmatmul.mubr.bf16.gmra.mrb[0].mxu0 %v306
  %v509 = vpop.f32.mrb[0].mxu0
  %v510 = vadd.f32 0.0, %v509
  %v511 = vpop.f32.mrb[0].mxu0
  %v512 = vpop.f32.mrb[0].mxu0
  %v513 = vadd.f32 0.0, %v512
  %v514 = vpop.f32.mrb[0].mxu0
  %515 = vmatprep.mubr.bf16.mxu0 0
  %516 = vmatmul.mubr.bf16.gmra.mrb[0].mxu0 %v309
  %v517 = vpop.f32.mrb[0].mxu0
  %v518 = vadd.f32 0.0, %v517
  %v519 = vpop.f32.mrb[0].mxu0
  %v520 = vpop.f32.mrb[0].mxu0
  %v521 = vadd.f32 0.0, %v520
  %v522 = vpop.f32.mrb[0].mxu0
  %523 = vmatprep.mubr.bf16.mxu0 0
  %524 = vmatmul.mubr.bf16.gmra.mrb[0].mxu0 %v312
  %v525 = vpop.f32.mrb[0].mxu0
  %v526 = vadd.f32 0.0, %v525
  %v527 = vpop.f32.mrb[0].mxu0
  %v528 = vpop.f32.mrb[0].mxu0
  %v529 = vadd.f32 0.0, %v528
  %v530 = vpop.f32.mrb[0].mxu0
  %531 = vmatprep.mubr.bf16.mxu0 0
  %532 = vmatmul.mubr.bf16.gmra.mrb[0].mxu0 %v315
  %v533 = vpop.f32.mrb[0].mxu0
  %v534 = vadd.f32 0.0, %v533
  %v535 = vpop.f32.mrb[0].mxu0
  %v536 = vpop.f32.mrb[0].mxu0
  %v537 = vadd.f32 0.0, %v536
  %v538 = vpop.f32.mrb[0].mxu0
  %539 = vmatprep.mubr.bf16.mxu0 0
  %540 = vmatmul.mubr.bf16.gmra.mrb[0].mxu0 %v318
  %v541 = vpop.f32.mrb[0].mxu0
  %v542 = vadd.f32 0.0, %v541
  %v543 = vpop.f32.mrb[0].mxu0
  %v544 = vpop.f32.mrb[0].mxu0
  %v545 = vadd.f32 0.0, %v544
  %v546 = vpop.f32.mrb[0].mxu0
  %547 = vmatprep.mubr.bf16.mxu0 0
  %548 = vmatmul.mubr.bf16.gmra.mrb[0].mxu0 %v321
  %v549 = vpop.f32.mrb[0].mxu0
  %v550 = vadd.f32 0.0, %v549
  %v551 = vpop.f32.mrb[0].mxu0
  %v552 = vpop.f32.mrb[0].mxu0
  %v553 = vadd.f32 0.0, %v552
  %v554 = vpop.f32.mrb[0].mxu0
  %555 = vmatprep.mubr.bf16.mxu0 0
  %556 = vmatmul.mubr.bf16.gmra.mrb[0].mxu0 %v324
  %v557 = vpop.f32.mrb[0].mxu0
  %v558 = vadd.f32 0.0, %v557
  %v559 = vpop.f32.mrb[0].mxu0
  %v560 = vpop.f32.mrb[0].mxu0
  %v561 = vadd.f32 0.0, %v560
  %v562 = vpop.f32.mrb[0].mxu0
  %563 = vmatprep.mubr.bf16.mxu0 0
  %564 = vmatmul.mubr.bf16.gmra.mrb[0].mxu0 %v327
  %v565 = vpop.f32.mrb[0].mxu0
  %v566 = vadd.f32 0.0, %v565
  %v567 = vpop.f32.mrb[0].mxu0
  %v568 = vpop.f32.mrb[0].mxu0
  %v569 = vadd.f32 0.0, %v568
  %v570 = vpop.f32.mrb[0].mxu0
  %571 = vmatprep.mubr.bf16.mxu0 0
  %572 = vmatmul.mubr.bf16.gmra.mrb[0].mxu0 %v330
  %v573 = vpop.f32.mrb[0].mxu0
  %v574 = vadd.f32 0.0, %v573
  %v575 = vpop.f32.mrb[0].mxu0
  %v576 = vpop.f32.mrb[0].mxu0
  %v577 = vadd.f32 0.0, %v576
  %v578 = vpop.f32.mrb[0].mxu0
  %579 = vmatprep.mubr.bf16.mxu0 0
  %580 = vmatmul.mubr.bf16.gmra.mrb[0].mxu0 %v333
  %v581 = vpop.f32.mrb[0].mxu0
  %v582 = vadd.f32 0.0, %v581
  %v583 = vpop.f32.mrb[0].mxu0
  %v584 = vpop.f32.mrb[0].mxu0
  %v585 = vadd.f32 0.0, %v584
  %v586 = vpop.f32.mrb[0].mxu0
  %587 = vmatprep.mubr.bf16.mxu0 0
  %588 = vmatmul.mubr.bf16.gmra.mrb[0].mxu0 %v336
  %v589 = vpop.f32.mrb[0].mxu0
  %v590 = vadd.f32 0.0, %v589
  %v591 = vpop.f32.mrb[0].mxu0
  %v592 = vpop.f32.mrb[0].mxu0
  %v593 = vadd.f32 0.0, %v592
  %v594 = vpop.f32.mrb[0].mxu0
  %595 = vmatprep.mubr.bf16.mxu0 0
  %596 = vmatmul.mubr.bf16.gmra.mrb[0].mxu0 %v339
  %v597 = vpop.f32.mrb[0].mxu0
  %v598 = vadd.f32 0.0, %v597
  %v599 = vpop.f32.mrb[0].mxu0
  %v600 = vpop.f32.mrb[0].mxu0
  %v601 = vadd.f32 0.0, %v600
  %v602 = vpop.f32.mrb[0].mxu0
  %603 = vmatprep.mubr.bf16.mxu0 0
  %604 = vmatmul.mubr.bf16.gmra.mrb[0].mxu0 %v342
  %v605 = vpop.f32.mrb[0].mxu0
  %v606 = vadd.f32 0.0, %v605
  %v607 = vpop.f32.mrb[0].mxu0
  %v608 = vpop.f32.mrb[0].mxu0
  %v609 = vadd.f32 0.0, %v608
  %v610 = vpop.f32.mrb[0].mxu0
  %611 = vmatprep.mubr.bf16.mxu0 0
  %612 = vmatmul.mubr.bf16.gmra.mrb[0].mxu0 %v345
  %v613 = vpop.f32.mrb[0].mxu0
  %v614 = vadd.f32 0.0, %v613
  %v615 = vpop.f32.mrb[0].mxu0
  %v616 = vpop.f32.mrb[0].mxu0
  %v617 = vadd.f32 0.0, %v616
  %v618 = vpop.f32.mrb[0].mxu0
  %619 = vmatprep.mubr.bf16.mxu0 0
  %620 = vmatmul.mubr.bf16.gmra.mrb[0].mxu0 %v348
  %v621 = vpop.f32.mrb[0].mxu0
  %v622 = vadd.f32 0.0, %v621
  %v623 = vpop.f32.mrb[0].mxu0
  %v624 = vpop.f32.mrb[0].mxu0
  %v625 = vadd.f32 0.0, %v624
  %v626 = vpop.f32.mrb[0].mxu0
  %627 = vmatprep.mubr.bf16.mxu0 0
  %628 = vmatmul.mubr.bf16.gmra.mrb[0].mxu0 %v351
  %v629 = vpop.f32.mrb[0].mxu0
  %v630 = vadd.f32 0.0, %v629
  %v631 = vpop.f32.mrb[0].mxu0
  %v632 = vpop.f32.mrb[0].mxu0
  %v633 = vadd.f32 0.0, %v632
  %v634 = vpop.f32.mrb[0].mxu0
  %635 = vmatprep.mubr.bf16.mxu0 0
  %636 = vmatmul.mubr.bf16.gmra.mrb[0].mxu0 %v354
  %v637 = vpop.f32.mrb[0].mxu0
  %v638 = vadd.f32 0.0, %v637
  %v639 = vpop.f32.mrb[0].mxu0
  %v640 = vpop.f32.mrb[0].mxu0
  %v641 = vadd.f32 0.0, %v640
  %v642 = vpop.f32.mrb[0].mxu0
  %643 = vmatprep.mubr.bf16.mxu0 0
  %644 = vmatmul.mubr.bf16.gmra.mrb[0].mxu0 %v357
  %v645 = vpop.f32.mrb[0].mxu0
  %v646 = vadd.f32 0.0, %v645
  %v647 = vpop.f32.mrb[0].mxu0
  %v648 = vpop.f32.mrb[0].mxu0
  %v649 = vadd.f32 0.0, %v648
  %v650 = vpop.f32.mrb[0].mxu0
  %651 = vdwg.mxu0
  %v652 = vld [vmem:[%s2] sm:$0x1]
  %v654 = vlaneseq
  %v655 = vshrl.u32 %v654, 7
  %v656 = vsub.s32 0, %v655
  %v657 = vrot.slane %v652, %v656
  %v659 = vmul.f32 %v398, %v657
  %v660 = vmul.f32 %v401, %v657
  %v661 = vmul.f32 %v406, %v657
  %v662 = vmul.f32 %v409, %v657
  %v663 = vmul.f32 %v414, %v657
  %v664 = vmul.f32 %v417, %v657
  %v665 = vmul.f32 %v422, %v657
  %v666 = vmul.f32 %v425, %v657
  %v667 = vmul.f32 %v430, %v657
  %v668 = vmul.f32 %v433, %v657
  %v669 = vmul.f32 %v438, %v657
  %v670 = vmul.f32 %v441, %v657
  %v671 = vmul.f32 %v446, %v657
  %v672 = vmul.f32 %v449, %v657
  %v673 = vmul.f32 %v454, %v657
  %v674 = vmul.f32 %v457, %v657
  %v675 = vmul.f32 %v462, %v657
  %v676 = vmul.f32 %v465, %v657
  %v677 = vmul.f32 %v470, %v657
  %v678 = vmul.f32 %v473, %v657
  %v679 = vmul.f32 %v478, %v657
  %v680 = vmul.f32 %v481, %v657
  %v681 = vmul.f32 %v486, %v657
  %v682 = vmul.f32 %v489, %v657
  %v683 = vmul.f32 %v494, %v657
  %v684 = vmul.f32 %v497, %v657
  %v685 = vmul.f32 %v502, %v657
  %v686 = vmul.f32 %v505, %v657
  %v687 = vmul.f32 %v510, %v657
  %v688 = vmul.f32 %v513, %v657
  %v689 = vmul.f32 %v518, %v657
  %v690 = vmul.f32 %v521, %v657
  %v691 = vmul.f32 %v526, %v657
  %v692 = vmul.f32 %v529, %v657
  %v693 = vmul.f32 %v534, %v657
  %v694 = vmul.f32 %v537, %v657
  %v695 = vmul.f32 %v542, %v657
  %v696 = vmul.f32 %v545, %v657
  %v697 = vmul.f32 %v550, %v657
  %v698 = vmul.f32 %v553, %v657
  %v699 = vmul.f32 %v558, %v657
  %v700 = vmul.f32 %v561, %v657
  %v701 = vmul.f32 %v566, %v657
  %v702 = vmul.f32 %v569, %v657
  %v703 = vmul.f32 %v574, %v657
  %v704 = vmul.f32 %v577, %v657
  %v705 = vmul.f32 %v582, %v657
  %v706 = vmul.f32 %v585, %v657
  %v707 = vmul.f32 %v590, %v657
  %v708 = vmul.f32 %v593, %v657
  %v709 = vmul.f32 %v598, %v657
  %v710 = vmul.f32 %v601, %v657
  %v711 = vmul.f32 %v606, %v657
  %v712 = vmul.f32 %v609, %v657
  %v713 = vmul.f32 %v614, %v657
  %v714 = vmul.f32 %v617, %v657
  %v715 = vmul.f32 %v622, %v657
  %v716 = vmul.f32 %v625, %v657
  %v717 = vmul.f32 %v630, %v657
  %v718 = vmul.f32 %v633, %v657
  %v719 = vmul.f32 %v638, %v657
  %v720 = vmul.f32 %v641, %v657
  %v721 = vmul.f32 %v646, %v657
  %v722 = vmul.f32 %v649, %v657
  %v723 = vld [vmem:[%s3] sm:$0x1]
  %v725 = vlaneseq
  %v726 = vshrl.u32 %v725, 7
  %v727 = vsub.s32 0, %v726
  %v728 = vrot.slane %v723, %v727
  %v730 = vadd.f32 %v659, %v728
  %v731 = vadd.f32 %v660, %v728
  %v732 = vadd.f32 %v661, %v728
  %v733 = vadd.f32 %v662, %v728
  %v734 = vadd.f32 %v663, %v728
  %v735 = vadd.f32 %v664, %v728
  %v736 = vadd.f32 %v665, %v728
  %v737 = vadd.f32 %v666, %v728
  %v738 = vadd.f32 %v667, %v728
  %v739 = vadd.f32 %v668, %v728
  %v740 = vadd.f32 %v669, %v728
  %v741 = vadd.f32 %v670, %v728
  %v742 = vadd.f32 %v671, %v728
  %v743 = vadd.f32 %v672, %v728
  %v744 = vadd.f32 %v673, %v728
  %v745 = vadd.f32 %v674, %v728
  %v746 = vadd.f32 %v675, %v728
  %v747 = vadd.f32 %v676, %v728
  %v748 = vadd.f32 %v677, %v728
  %v749 = vadd.f32 %v678, %v728
  %v750 = vadd.f32 %v679, %v728
  %v751 = vadd.f32 %v680, %v728
  %v752 = vadd.f32 %v681, %v728
  %v753 = vadd.f32 %v682, %v728
  %v754 = vadd.f32 %v683, %v728
  %v755 = vadd.f32 %v684, %v728
  %v756 = vadd.f32 %v685, %v728
  %v757 = vadd.f32 %v686, %v728
  %v758 = vadd.f32 %v687, %v728
  %v759 = vadd.f32 %v688, %v728
  %v760 = vadd.f32 %v689, %v728
  %v761 = vadd.f32 %v690, %v728
  %v762 = vadd.f32 %v691, %v728
  %v763 = vadd.f32 %v692, %v728
  %v764 = vadd.f32 %v693, %v728
  %v765 = vadd.f32 %v694, %v728
  %v766 = vadd.f32 %v695, %v728
  %v767 = vadd.f32 %v696, %v728
  %v768 = vadd.f32 %v697, %v728
  %v769 = vadd.f32 %v698, %v728
  %v770 = vadd.f32 %v699, %v728
  %v771 = vadd.f32 %v700, %v728
  %v772 = vadd.f32 %v701, %v728
  %v773 = vadd.f32 %v702, %v728
  %v774 = vadd.f32 %v703, %v728
  %v775 = vadd.f32 %v704, %v728
  %v776 = vadd.f32 %v705, %v728
  %v777 = vadd.f32 %v706, %v728
  %v778 = vadd.f32 %v707, %v728
  %v779 = vadd.f32 %v708, %v728
  %v780 = vadd.f32 %v709, %v728
  %v781 = vadd.f32 %v710, %v728
  %v782 = vadd.f32 %v711, %v728
  %v783 = vadd.f32 %v712, %v728
  %v784 = vadd.f32 %v713, %v728
  %v785 = vadd.f32 %v714, %v728
  %v786 = vadd.f32 %v715, %v728
  %v787 = vadd.f32 %v716, %v728
  %v788 = vadd.f32 %v717, %v728
  %v789 = vadd.f32 %v718, %v728
  %v790 = vadd.f32 %v719, %v728
  %v791 = vadd.f32 %v720, %v728
  %v792 = vadd.f32 %v721, %v728
  %v793 = vadd.f32 %v722, %v728
  %vm794 = vcmp.gt.f32.partialorder %v730, 0.0
  %vm795 = vcmp.gt.f32.partialorder %v731, 0.0
  %vm796 = vcmp.gt.f32.partialorder %v732, 0.0
  %vm797 = vcmp.gt.f32.partialorder %v733, 0.0
  %vm798 = vcmp.gt.f32.partialorder %v734, 0.0
  %vm799 = vcmp.gt.f32.partialorder %v735, 0.0
  %vm800 = vcmp.gt.f32.partialorder %v736, 0.0
  %vm801 = vcmp.gt.f32.partialorder %v737, 0.0
  %vm802 = vcmp.gt.f32.partialorder %v738, 0.0
  %vm803 = vcmp.gt.f32.partialorder %v739, 0.0
  %vm804 = vcmp.gt.f32.partialorder %v740, 0.0
  %vm805 = vcmp.gt.f32.partialorder %v741, 0.0
  %vm806 = vcmp.gt.f32.partialorder %v742, 0.0
  %vm807 = vcmp.gt.f32.partialorder %v743, 0.0
  %vm808 = vcmp.gt.f32.partialorder %v744, 0.0
  %vm809 = vcmp.gt.f32.partialorder %v745, 0.0
  %vm810 = vcmp.gt.f32.partialorder %v746, 0.0
  %vm811 = vcmp.gt.f32.partialorder %v747, 0.0
  %vm812 = vcmp.gt.f32.partialorder %v748, 0.0
  %vm813 = vcmp.gt.f32.partialorder %v749, 0.0
  %vm814 = vcmp.gt.f32.partialorder %v750, 0.0
  %vm815 = vcmp.gt.f32.partialorder %v751, 0.0
  %vm816 = vcmp.gt.f32.partialorder %v752, 0.0
  %vm817 = vcmp.gt.f32.partialorder %v753, 0.0
  %vm818 = vcmp.gt.f32.partialorder %v754, 0.0
  %vm819 = vcmp.gt.f32.partialorder %v755, 0.0
  %vm820 = vcmp.gt.f32.partialorder %v756, 0.0
  %vm821 = vcmp.gt.f32.partialorder %v757, 0.0
  %vm822 = vcmp.gt.f32.partialorder %v758, 0.0
  %vm823 = vcmp.gt.f32.partialorder %v759, 0.0
  %vm824 = vcmp.gt.f32.partialorder %v760, 0.0
  %vm825 = vcmp.gt.f32.partialorder %v761, 0.0
  %vm826 = vcmp.gt.f32.partialorder %v762, 0.0
  %vm827 = vcmp.gt.f32.partialorder %v763, 0.0
  %vm828 = vcmp.gt.f32.partialorder %v764, 0.0
  %vm829 = vcmp.gt.f32.partialorder %v765, 0.0
  %vm830 = vcmp.gt.f32.partialorder %v766, 0.0
  %vm831 = vcmp.gt.f32.partialorder %v767, 0.0
  %vm832 = vcmp.gt.f32.partialorder %v768, 0.0
  %vm833 = vcmp.gt.f32.partialorder %v769, 0.0
  %vm834 = vcmp.gt.f32.partialorder %v770, 0.0
  %vm835 = vcmp.gt.f32.partialorder %v771, 0.0
  %vm836 = vcmp.gt.f32.partialorder %v772, 0.0
  %vm837 = vcmp.gt.f32.partialorder %v773, 0.0
  %vm838 = vcmp.gt.f32.partialorder %v774, 0.0
  %vm839 = vcmp.gt.f32.partialorder %v775, 0.0
  %vm840 = vcmp.gt.f32.partialorder %v776, 0.0
  %vm841 = vcmp.gt.f32.partialorder %v777, 0.0
  %vm842 = vcmp.gt.f32.partialorder %v778, 0.0
  %vm843 = vcmp.gt.f32.partialorder %v779, 0.0
  %vm844 = vcmp.gt.f32.partialorder %v780, 0.0
  %vm845 = vcmp.gt.f32.partialorder %v781, 0.0
  %vm846 = vcmp.gt.f32.partialorder %v782, 0.0
  %vm847 = vcmp.gt.f32.partialorder %v783, 0.0
  %vm848 = vcmp.gt.f32.partialorder %v784, 0.0
  %vm849 = vcmp.gt.f32.partialorder %v785, 0.0
  %vm850 = vcmp.gt.f32.partialorder %v786, 0.0
  %vm851 = vcmp.gt.f32.partialorder %v787, 0.0
  %vm852 = vcmp.gt.f32.partialorder %v788, 0.0
  %vm853 = vcmp.gt.f32.partialorder %v789, 0.0
  %vm854 = vcmp.gt.f32.partialorder %v790, 0.0
  %vm855 = vcmp.gt.f32.partialorder %v791, 0.0
  %vm856 = vcmp.gt.f32.partialorder %v792, 0.0
  %vm857 = vcmp.gt.f32.partialorder %v793, 0.0
  %v858 = vmul.f32 %v730, 0.1
  %v859 = vmul.f32 %v731, 0.1
  %v860 = vmul.f32 %v732, 0.1
  %v861 = vmul.f32 %v733, 0.1
  %v862 = vmul.f32 %v734, 0.1
  %v863 = vmul.f32 %v735, 0.1
  %v864 = vmul.f32 %v736, 0.1
  %v865 = vmul.f32 %v737, 0.1
  %v866 = vmul.f32 %v738, 0.1
  %v867 = vmul.f32 %v739, 0.1
  %v868 = vmul.f32 %v740, 0.1
  %v869 = vmul.f32 %v741, 0.1
  %v870 = vmul.f32 %v742, 0.1
  %v871 = vmul.f32 %v743, 0.1
  %v872 = vmul.f32 %v744, 0.1
  %v873 = vmul.f32 %v745, 0.1
  %v874 = vmul.f32 %v746, 0.1
  %v875 = vmul.f32 %v747, 0.1
  %v876 = vmul.f32 %v748, 0.1
  %v877 = vmul.f32 %v749, 0.1
  %v878 = vmul.f32 %v750, 0.1
  %v879 = vmul.f32 %v751, 0.1
  %v880 = vmul.f32 %v752, 0.1
  %v881 = vmul.f32 %v753, 0.1
  %v882 = vmul.f32 %v754, 0.1
  %v883 = vmul.f32 %v755, 0.1
  %v884 = vmul.f32 %v756, 0.1
  %v885 = vmul.f32 %v757, 0.1
  %v886 = vmul.f32 %v758, 0.1
  %v887 = vmul.f32 %v759, 0.1
  %v888 = vmul.f32 %v760, 0.1
  %v889 = vmul.f32 %v761, 0.1
  %v890 = vmul.f32 %v762, 0.1
  %v891 = vmul.f32 %v763, 0.1
  %v892 = vmul.f32 %v764, 0.1
  %v893 = vmul.f32 %v765, 0.1
  %v894 = vmul.f32 %v766, 0.1
  %v895 = vmul.f32 %v767, 0.1
  %v896 = vmul.f32 %v768, 0.1
  %v897 = vmul.f32 %v769, 0.1
  %v898 = vmul.f32 %v770, 0.1
  %v899 = vmul.f32 %v771, 0.1
  %v900 = vmul.f32 %v772, 0.1
  %v901 = vmul.f32 %v773, 0.1
  %v902 = vmul.f32 %v774, 0.1
  %v903 = vmul.f32 %v775, 0.1
  %v904 = vmul.f32 %v776, 0.1
  %v905 = vmul.f32 %v777, 0.1
  %v906 = vmul.f32 %v778, 0.1
  %v907 = vmul.f32 %v779, 0.1
  %v908 = vmul.f32 %v780, 0.1
  %v909 = vmul.f32 %v781, 0.1
  %v910 = vmul.f32 %v782, 0.1
  %v911 = vmul.f32 %v783, 0.1
  %v912 = vmul.f32 %v784, 0.1
  %v913 = vmul.f32 %v785, 0.1
  %v914 = vmul.f32 %v786, 0.1
  %v915 = vmul.f32 %v787, 0.1
  %v916 = vmul.f32 %v788, 0.1
  %v917 = vmul.f32 %v789, 0.1
  %v918 = vmul.f32 %v790, 0.1
  %v919 = vmul.f32 %v791, 0.1
  %v920 = vmul.f32 %v792, 0.1
  %v921 = vmul.f32 %v793, 0.1
  %v922 = vsel %vm794, %v730, %v858
  %v923 = vsel %vm795, %v731, %v859
  %v924 = vsel %vm796, %v732, %v860
  %v925 = vsel %vm797, %v733, %v861
  %v926 = vsel %vm798, %v734, %v862
  %v927 = vsel %vm799, %v735, %v863
  %v928 = vsel %vm800, %v736, %v864
  %v929 = vsel %vm801, %v737, %v865
  %v930 = vsel %vm802, %v738, %v866
  %v931 = vsel %vm803, %v739, %v867
  %v932 = vsel %vm804, %v740, %v868
  %v933 = vsel %vm805, %v741, %v869
  %v934 = vsel %vm806, %v742, %v870
  %v935 = vsel %vm807, %v743, %v871
  %v936 = vsel %vm808, %v744, %v872
  %v937 = vsel %vm809, %v745, %v873
  %v938 = vsel %vm810, %v746, %v874
  %v939 = vsel %vm811, %v747, %v875
  %v940 = vsel %vm812, %v748, %v876
  %v941 = vsel %vm813, %v749, %v877
  %v942 = vsel %vm814, %v750, %v878
  %v943 = vsel %vm815, %v751, %v879
  %v944 = vsel %vm816, %v752, %v880
  %v945 = vsel %vm817, %v753, %v881
  %v946 = vsel %vm818, %v754, %v882
  %v947 = vsel %vm819, %v755, %v883
  %v948 = vsel %vm820, %v756, %v884
  %v949 = vsel %vm821, %v757, %v885
  %v950 = vsel %vm822, %v758, %v886
  %v951 = vsel %vm823, %v759, %v887
  %v952 = vsel %vm824, %v760, %v888
  %v953 = vsel %vm825, %v761, %v889
  %v954 = vsel %vm826, %v762, %v890
  %v955 = vsel %vm827, %v763, %v891
  %v956 = vsel %vm828, %v764, %v892
  %v957 = vsel %vm829, %v765, %v893
  %v958 = vsel %vm830, %v766, %v894
  %v959 = vsel %vm831, %v767, %v895
  %v960 = vsel %vm832, %v768, %v896
  %v961 = vsel %vm833, %v769, %v897
  %v962 = vsel %vm834, %v770, %v898
  %v963 = vsel %vm835, %v771, %v899
  %v964 = vsel %vm836, %v772, %v900
  %v965 = vsel %vm837, %v773, %v901
  %v966 = vsel %vm838, %v774, %v902
  %v967 = vsel %vm839, %v775, %v903
  %v968 = vsel %vm840, %v776, %v904
  %v969 = vsel %vm841, %v777, %v905
  %v970 = vsel %vm842, %v778, %v906
  %v971 = vsel %vm843, %v779, %v907
  %v972 = vsel %vm844, %v780, %v908
  %v973 = vsel %vm845, %v781, %v909
  %v974 = vsel %vm846, %v782, %v910
  %v975 = vsel %vm847, %v783, %v911
  %v976 = vsel %vm848, %v784, %v912
  %v977 = vsel %vm849, %v785, %v913
  %v978 = vsel %vm850, %v786, %v914
  %v979 = vsel %vm851, %v787, %v915
  %v980 = vsel %vm852, %v788, %v916
  %v981 = vsel %vm853, %v789, %v917
  %v982 = vsel %vm854, %v790, %v918
  %v983 = vsel %vm855, %v791, %v919
  %v984 = vsel %vm856, %v792, %v920
  %v985 = vsel %vm857, %v793, %v921
  %986 = vst [vmem:[%s4] sm:$0xff] %v922
  %987 = vst [vmem:[%s4 + $0x8] sm:$0xff] %v923
  %988 = vst [vmem:[%s4 + $0x10] sm:$0xff] %v924
  %989 = vst [vmem:[%s4 + $0x18] sm:$0xff] %v925
  %990 = vst [vmem:[%s4 + $0x20] sm:$0xff] %v926
  %991 = vst [vmem:[%s4 + $0x28] sm:$0xff] %v927
  %992 = vst [vmem:[%s4 + $0x30] sm:$0xff] %v928
  %993 = vst [vmem:[%s4 + $0x38] sm:$0xff] %v929
  %994 = vst [vmem:[%s4 + $0x40] sm:$0xff] %v930
  %995 = vst [vmem:[%s4 + $0x48] sm:$0xff] %v931
  %996 = vst [vmem:[%s4 + $0x50] sm:$0xff] %v932
  %997 = vst [vmem:[%s4 + $0x58] sm:$0xff] %v933
  %998 = vst [vmem:[%s4 + $0x60] sm:$0xff] %v934
  %999 = vst [vmem:[%s4 + $0x68] sm:$0xff] %v935
  %1000 = vst [vmem:[%s4 + $0x70] sm:$0xff] %v936
  %1001 = vst [vmem:[%s4 + $0x78] sm:$0xff] %v937
  %1002 = vst [vmem:[%s4 + $0x80] sm:$0xff] %v938
  %1003 = vst [vmem:[%s4 + $0x88] sm:$0xff] %v939
  %1004 = vst [vmem:[%s4 + $0x90] sm:$0xff] %v940
  %1005 = vst [vmem:[%s4 + $0x98] sm:$0xff] %v941
  %1006 = vst [vmem:[%s4 + $0xa0] sm:$0xff] %v942
  %1007 = vst [vmem:[%s4 + $0xa8] sm:$0xff] %v943
  %1008 = vst [vmem:[%s4 + $0xb0] sm:$0xff] %v944
  %1009 = vst [vmem:[%s4 + $0xb8] sm:$0xff] %v945
  %1010 = vst [vmem:[%s4 + $0xc0] sm:$0xff] %v946
  %1011 = vst [vmem:[%s4 + $0xc8] sm:$0xff] %v947
  %1012 = vst [vmem:[%s4 + $0xd0] sm:$0xff] %v948
  %1013 = vst [vmem:[%s4 + $0xd8] sm:$0xff] %v949
  %1014 = vst [vmem:[%s4 + $0xe0] sm:$0xff] %v950
  %1015 = vst [vmem:[%s4 + $0xe8] sm:$0xff] %v951
  %1016 = vst [vmem:[%s4 + $0xf0] sm:$0xff] %v952
  %1017 = vst [vmem:[%s4 + $0xf8] sm:$0xff] %v953
  %1018 = vst [vmem:[%s4 + $0x100] sm:$0xff] %v954
  %1019 = vst [vmem:[%s4 + $0x108] sm:$0xff] %v955
  %1020 = vst [vmem:[%s4 + $0x110] sm:$0xff] %v956
  %1021 = vst [vmem:[%s4 + $0x118] sm:$0xff] %v957
  %1022 = vst [vmem:[%s4 + $0x120] sm:$0xff] %v958
  %1023 = vst [vmem:[%s4 + $0x128] sm:$0xff] %v959
  %1024 = vst [vmem:[%s4 + $0x130] sm:$0xff] %v960
  %1025 = vst [vmem:[%s4 + $0x138] sm:$0xff] %v961
  %1026 = vst [vmem:[%s4 + $0x140] sm:$0xff] %v962
  %1027 = vst [vmem:[%s4 + $0x148] sm:$0xff] %v963
  %1028 = vst [vmem:[%s4 + $0x150] sm:$0xff] %v964
  %1029 = vst [vmem:[%s4 + $0x158] sm:$0xff] %v965
  %1030 = vst [vmem:[%s4 + $0x160] sm:$0xff] %v966
  %1031 = vst [vmem:[%s4 + $0x168] sm:$0xff] %v967
  %1032 = vst [vmem:[%s4 + $0x170] sm:$0xff] %v968
  %1033 = vst [vmem:[%s4 + $0x178] sm:$0xff] %v969
  %1034 = vst [vmem:[%s4 + $0x180] sm:$0xff] %v970
  %1035 = vst [vmem:[%s4 + $0x188] sm:$0xff] %v971
  %1036 = vst [vmem:[%s4 + $0x190] sm:$0xff] %v972
  %1037 = vst [vmem:[%s4 + $0x198] sm:$0xff] %v973
  %1038 = vst [vmem:[%s4 + $0x1a0] sm:$0xff] %v974
  %1039 = vst [vmem:[%s4 + $0x1a8] sm:$0xff] %v975
  %1040 = vst [vmem:[%s4 + $0x1b0] sm:$0xff] %v976
  %1041 = vst [vmem:[%s4 + $0x1b8] sm:$0xff] %v977
  %1042 = vst [vmem:[%s4 + $0x1c0] sm:$0xff] %v978
  %1043 = vst [vmem:[%s4 + $0x1c8] sm:$0xff] %v979
  %1044 = vst [vmem:[%s4 + $0x1d0] sm:$0xff] %v980
  %1045 = vst [vmem:[%s4 + $0x1d8] sm:$0xff] %v981
  %1046 = vst [vmem:[%s4 + $0x1e0] sm:$0xff] %v982
  %1047 = vst [vmem:[%s4 + $0x1e8] sm:$0xff] %v983
  %1048 = vst [vmem:[%s4 + $0x1f0] sm:$0xff] %v984
  %1049 = vst [vmem:[%s4 + $0x1f8] sm:$0xff] %v985
  // Predicated region
  $region18: #{cnn_block_forward.3} parent=0 // pred_check
    _
  $region19: #{cnn_block_forward.3} parent=0 // pred_check_branch
    %1051 = sbr.rel (0) target = $region21
  $region20: #{cnn_block_forward.3} parent=0 // pred_region
    _
  $region21: #{cnn_block_forward.3} parent=0 // pred_fallthru
    _
  // Predicated region
  $region22: #{cnn_block_forward.3} parent=0 // pred_check
    _
  $region23: #{cnn_block_forward.3} parent=0 // pred_check_branch
    %1053 = sbr.rel (0) target = $region25
  $region24: #{cnn_block_forward.3} parent=0 // pred_region
    _
  $region25: #{cnn_block_forward.3} parent=0 // pred_fallthru
    _

</llo_original>
